<compile_context>
chip_gen: v7x
topology: tpu7x:2x2x1
jax: 0.10.0
libtpu: 0.0.40
codegen_flags: <defaults>
</compile_context>

<pallas_src>
import functools

import jax
import jax.numpy as jnp
from jax.experimental import pallas as pl
from jax.experimental.pallas import tpu as pltpu


_NEG_FILL = -3.0e4   # finite "minus infinity" for the masked max-pool
_WSUB = 8            # word rows per accumulator sub-block (f32 tile aligned)
_PSUB = 8            # pieces per inner sub-chunk (bounds the live slab)
_PCHUNK = 128        # pieces per grid step (lane-aligned mask chunk)


def _round_up(x, m):
    return (x + m - 1) // m * m


@functools.lru_cache(maxsize=None)
def _vmem_limit_bytes():
    """Generation-aware VMEM budget (~70% of physical; 64 MiB on v7x, 128 MiB on v5e/v6e)."""
    cap = None
    try:
        info_fn = getattr(pltpu, "get_tpu_info", None)
        if info_fn is not None:
            cap = getattr(info_fn(), "vmem_capacity_bytes", None)
    except Exception:        # best-effort hardware query; fall back below
        cap = None
    if not cap:
        cap = 64 << 20       # conservative fallback = v7x physical VMEM
    return max(32 << 20, min(int(cap * 0.7), 100 << 20))


# ----------------------------------------------------------------------------
# Kernel 1: get_word_feature — masked max pooling of piece features per word.
#   grid = (B, Pp/128); sequence_output streamed from HBM exactly once.
#   f32 [Wp, H] accumulator lives in VMEM scratch; bf16 output written once.
# ----------------------------------------------------------------------------
def _word_pool_kernel(mask_ref, seq_ref, out_ref, acc_ref, maskf_ref):
    # mask_ref : [1, Wp, 128] int8   (0/1)
    # seq_ref  : [1, 128, H]  f32
    # out_ref  : [1, Wp, H]   bf16   (written only at the last P chunk)
    # acc_ref  : [Wp, H]      f32    running-max accumulator (VMEM scratch)
    # maskf_ref: [Wp, 128]    f32    current mask chunk as f32 (VMEM scratch)
    p_chunk = pl.program_id(1)

    @pl.when(p_chunk == 0)
    def _init():
        acc_ref[...] = jnp.full_like(acc_ref, _NEG_FILL)

    # int8 mask is what crosses HBM; convert once per chunk (cheap VPU pass).
    maskf_ref[...] = mask_ref[0].astype(jnp.float32)

    n_w = acc_ref.shape[0] // _WSUB
    n_p = seq_ref.shape[1] // _PSUB

    def w_body(wi, carry):
        w0 = pl.multiple_of(wi * _WSUB, _WSUB)
        acc = acc_ref[pl.ds(w0, _WSUB), :]               # [WSUB, H] f32
        m_w = maskf_ref[pl.ds(w0, _WSUB), :]             # [WSUB, 128] f32
        # Static inner loop over 8-piece sub-chunks: the live slab is only
        # [WSUB, PSUB, H] (vs the [Wp, 128, H] of a naive formulation).
        for pc in range(n_p):
            p0 = pc * _PSUB
            sub_s = seq_ref[0, p0:p0 + _PSUB, :].astype(jnp.float32)   # [PSUB, H]
            sub_m = m_w[:, p0:p0 + _PSUB]                              # [WSUB, PSUB]
            cand = jnp.where(sub_m[:, :, None] > 0.0,
                             sub_s[None, :, :], _NEG_FILL)             # [WSUB, PSUB, H]
            acc = jnp.maximum(acc, jnp.max(cand, axis=1))
        acc_ref[pl.ds(w0, _WSUB), :] = acc
        return carry

    jax.lax.fori_loop(0, n_w, w_body, 0)

    @pl.when(p_chunk == pl.num_programs(1) - 1)
    def _finalize():
        out_ref[0] = acc_ref[...].astype(out_ref.dtype)


def word_pool(seq_padded, mask_i8, vmem_limit):
    """seq_padded: [B, Pp, H] f32, mask_i8: [B, Wp, Pp] int8 -> [B, Wp, H] bf16."""
    B, Pp, H = seq_padded.shape
    Wp = mask_i8.shape[1]
    return pl.pallas_call(
        _word_pool_kernel,
        out_shape=jax.ShapeDtypeStruct((B, Wp, H), jnp.bfloat16),
        grid=(B, Pp // _PCHUNK),
        in_specs=[
            pl.BlockSpec((1, Wp, _PCHUNK), lambda b, p: (b, 0, p)),   # int8 mask chunk
            pl.BlockSpec((1, _PCHUNK, H), lambda b, p: (b, p, 0)),    # sequence_output chunk
        ],
        out_specs=pl.BlockSpec((1, Wp, H), lambda b, p: (b, 0, 0)),   # revisited across p
        scratch_shapes=[
            pltpu.VMEM((Wp, H), jnp.float32),          # running-max accumulator
            pltpu.VMEM((Wp, _PCHUNK), jnp.float32),    # f32 view of current mask chunk
        ],
        compiler_params=pltpu.CompilerParams(
            dimension_semantics=("parallel", "arbitrary"),
            vmem_limit_bytes=vmem_limit,
        ),
    )(mask_i8, seq_padded)


# ----------------------------------------------------------------------------
# Kernel 2: start/end MLPs, fused into a single bf16 matmul over M = B*Wp rows.
# ----------------------------------------------------------------------------
def _mlp_kernel(wf_ref, w_ref, b_ref, start_ref, end_ref):
    # wf_ref: [Mt, H] bf16, w_ref: [H, 2*Bf] bf16, b_ref: [1, 2*Bf] f32
    z = jnp.dot(wf_ref[...], w_ref[...], preferred_element_type=jnp.float32) + b_ref[...]
    bf = start_ref.shape[-1]
    start_ref[...] = jax.nn.gelu(z[:, :bf], approximate=True).astype(start_ref.dtype)
    end_ref[...] = jax.nn.gelu(z[:, bf:], approximate=True).astype(end_ref.dtype)


def _pick_m_tile(M):
    # M = B * Wp is always a multiple of 128; prefer grid extent >= 2 (v7x 2 TCs).
    for t in (512, 256, 128):
        if M % t == 0 and M // t >= 2:
            return t
    for t in (512, 256, 128):
        if M % t == 0:
            return t
    return M


def mlp_start_end(word_feature, w_se, b_se, vmem_limit):
    """word_feature: [B, Wp, H] bf16 -> (start, end) each [B, Wp, Bf] bf16."""
    B, Wp, H = word_feature.shape
    two_bf = w_se.shape[1]
    Bf = two_bf // 2
    M = B * Wp
    Mt = _pick_m_tile(M)
    wf2d = word_feature.reshape(M, H)
    # NOTE: w_se / b_se blocks have constant index maps (VMEM-resident); if the
    # compiler double-buffers them on v7x, pipeline_mode=pl.Buffered(1) reclaims
    # ~2.3 MB — left at the default here for portability.
    start2d, end2d = pl.pallas_call(
        _mlp_kernel,
        out_shape=(jax.ShapeDtypeStruct((M, Bf), jnp.bfloat16),
                   jax.ShapeDtypeStruct((M, Bf), jnp.bfloat16)),
        grid=(M // Mt,),
        in_specs=[
            pl.BlockSpec((Mt, H), lambda m: (m, 0)),        # word_feature rows (bf16)
            pl.BlockSpec((H, two_bf), lambda m: (0, 0)),    # fused [W_start | W_end] (bf16)
            pl.BlockSpec((1, two_bf), lambda m: (0, 0)),    # fused bias (f32)
        ],
        out_specs=[
            pl.BlockSpec((Mt, Bf), lambda m: (m, 0)),
            pl.BlockSpec((Mt, Bf), lambda m: (m, 0)),
        ],
        compiler_params=pltpu.CompilerParams(
            dimension_semantics=("parallel",),
            vmem_limit_bytes=vmem_limit,
        ),
    )(wf2d, w_se, b_se)
    return start2d.reshape(B, Wp, Bf), end2d.reshape(B, Wp, Bf)


# ----------------------------------------------------------------------------
# Kernel 3: Biaffine bilinear term, batch-blocked so the MXU M dim is filled.
#   bilinear[b, o, x, y] = start[b, x, :] @ Wmain[o] @ end[b, y, :]
# The "+1" row/column/corner biases and the loss mask are applied outside in a
# fused JAX epilogue (no per-(o,b) mask/bias re-streaming).
# ----------------------------------------------------------------------------
def _biaffine_kernel(x_ref, yt_ref, wm_ref, out_ref):
    # x_ref : [Bt*Wp, Bf] bf16 (start rows), yt_ref: [Bt, Bf, Wp] bf16 (end, pre-transposed)
    # wm_ref: [1, Bf, Bf] bf16 (label weight slab, resident across the batch axis)
    bt, bf, wp = yt_ref.shape
    tmp = jnp.dot(x_ref[...], wm_ref[0], preferred_element_type=jnp.float32)   # [Bt*Wp, Bf]
    tmp = tmp.astype(jnp.bfloat16).reshape(bt, wp, bf)
    res = jnp.einsum("bxf,bfy->bxy", tmp, yt_ref[...],
                     preferred_element_type=jnp.float32)                        # [Bt, Wp, Wp]
    out_ref[...] = res.reshape(bt, 1, wp, wp)


def _pick_batch_tile(B, Wp, Bf, vmem_limit):
    budget = vmem_limit // 2
    best = 1
    for bt in range(1, B + 1):
        if B % bt != 0:
            continue
        step_bytes = (2 * bt * Wp * Bf * 2 + bt * Wp * Wp * 4) * 2 + Bf * Bf * 2 * 2
        if step_bytes > budget:
            break
        best = bt
        if bt * Wp >= 256:       # enough to fill the 256-wide v6e/v7x MXU (128 on v5e)
            break
    return best


def biaffine_bilinear(start, end, wm, vmem_limit):
    """start/end: [B, Wp, Bf] bf16, wm: [O, Bf, Bf] bf16 -> [B, O, Wp, Wp] f32."""
    B, Wp, Bf = start.shape
    O = wm.shape[0]
    Bt = _pick_batch_tile(B, Wp, Bf, vmem_limit)
    start2d = start.reshape(B * Wp, Bf)
    end_t = jnp.swapaxes(end, 1, 2)                  # [B, Bf, Wp]: NN layout for 2nd matmul
    return pl.pallas_call(
        _biaffine_kernel,
        out_shape=jax.ShapeDtypeStruct((B, O, Wp, Wp), jnp.float32),
        grid=(O, B // Bt),                           # O outermost: extent >= 2 for v7x 2 TCs
        in_specs=[
            pl.BlockSpec((Bt * Wp, Bf), lambda o, bb: (bb, 0)),     # start rows (bf16)
            pl.BlockSpec((Bt, Bf, Wp), lambda o, bb: (bb, 0, 0)),   # end, pre-transposed (bf16)
            pl.BlockSpec((1, Bf, Bf), lambda o, bb: (o, 0, 0)),     # label weight slab (bf16)
        ],
        out_specs=pl.BlockSpec((Bt, 1, Wp, Wp), lambda o, bb: (bb, o, 0, 0)),
        compiler_params=pltpu.CompilerParams(
            dimension_semantics=("parallel", "parallel"),
            vmem_limit_bytes=vmem_limit,
        ),
    )(start2d, end_t, wm)


# ----------------------------------------------------------------------------
# Parameters (torch-style f32) and one-time kernel-friendly repacking.
# ----------------------------------------------------------------------------
def init_params(key, hidden_size, num_labels, vocab_size, biaffine_size=768):
    ks = jax.random.split(key, 6)
    f32 = jnp.float32
    return {
        "glove": jax.random.normal(ks[0], (vocab_size, 100), f32) * 0.1,
        "w_start": jax.random.normal(ks[1], (hidden_size, biaffine_size), f32) * 0.02,
        "b_start": jax.random.normal(ks[2], (1, biaffine_size), f32) * 0.01,
        "w_end": jax.random.normal(ks[3], (hidden_size, biaffine_size), f32) * 0.02,
        "b_end": jax.random.normal(ks[4], (1, biaffine_size), f32) * 0.01,
        "biaffine_w": jax.random.normal(
            ks[5], (num_labels, biaffine_size + 1, biaffine_size + 1), f32) * 0.01,
    }


def prepare_params(params):
    """One-time repack of torch-style f32 params into kernel-friendly form."""
    Bf = params["w_start"].shape[1]
    bw = params["biaffine_w"]                               # [O, Bf+1, Bf+1] f32
    return {
        "glove": params["glove"],
        # fused [H, 2*Bf] bf16 weight + f32 bias for the start/end MLPs
        "w_se": jnp.concatenate([params["w_start"], params["w_end"]],
                                axis=1).astype(jnp.bfloat16),
        "b_se": jnp.concatenate([params["b_start"], params["b_end"]],
                                axis=1).astype(jnp.float32),
        # biaffine weight split: bilinear slab for the MXU kernel, "+1" biases for the epilogue
        "bi_main": bw[:, :Bf, :Bf].astype(jnp.bfloat16),    # [O, Bf, Bf]
        "bi_row": bw[:, Bf, :Bf].astype(jnp.float32),       # [O, Bf]  (acts on end)
        "bi_col": bw[:, :Bf, Bf].astype(jnp.float32),       # [O, Bf]  (acts on start)
        "bi_corner": bw[:, Bf, Bf].astype(jnp.float32),     # [O]
    }


def mgree_forward(prepared, sequence_output, pieces2word, word_ids, loss_mask=None):
    B, P, H = sequence_output.shape
    W = pieces2word.shape[1]
    vmem_limit = _vmem_limit_bytes()

    # Pad W to a lane-dense multiple of 128 (biaffine output / start / end blocks)
    # and P to a multiple of 128 (piece chunks).  Padded words/pieces carry mask 0.
    Wp = _round_up(W, 128)
    Pp = _round_up(P, 128)
    mask_i8 = (pieces2word > 0).astype(jnp.int8)
    mask_i8 = jnp.pad(mask_i8, ((0, 0), (0, Wp - W), (0, Pp - P)))
    seq_p = jnp.pad(sequence_output, ((0, 0), (0, Pp - P), (0, 0)))

    # dropout(0.1) -> identity at inference.
    word_feature = word_pool(seq_p, mask_i8, vmem_limit)            # [B, Wp, H] bf16 (Pallas)

    glove_emb = prepared["glove"][word_ids]                         # [B, W, 100]
    # TODO(synk): bidirectional nn.LSTM over concat([glove_emb, word_feature]) not
    # implemented — in the original module its output never reaches the returned (scores, 0).
    del glove_emb

    start, end = mlp_start_end(word_feature, prepared["w_se"], prepared["b_se"],
                               vmem_limit)                          # [B, Wp, Bf] bf16 (Pallas)

    bilinear = biaffine_bilinear(start, end, prepared["bi_main"],
                                 vmem_limit)                        # [B, O, Wp, Wp] f32 (Pallas)

    # Fused JAX epilogue: "+1"-column rank-1/scalar biases, padding slice,
    # torch layout transpose, loss mask.  All cheap elementwise / tiny einsums.
    start_r = start[:, :W, :].astype(jnp.float32)
    end_r = end[:, :W, :].astype(jnp.float32)
    bias_x = jnp.einsum("bxf,of->box", start_r, prepared["bi_col"])   # [B, O, W]
    bias_y = jnp.einsum("byf,of->boy", end_r, prepared["bi_row"])     # [B, O, W]
    scores = (bilinear[:, :, :W, :W]
              + bias_x[:, :, :, None]
              + bias_y[:, :, None, :]
              + prepared["bi_corner"][None, :, None, None])
    scores = jnp.transpose(scores, (0, 2, 3, 1))                      # [B, W, W, O]
    if loss_mask is not None:
        m = loss_mask.astype(jnp.float32)[..., None]
        scores = scores * m - (1.0 - m) * 1.0e12
    return scores, 0


# ----------------------------------------------------------------------------
# Pure-JAX f32 reference (torch semantics) for the correctness sanity check.
# ----------------------------------------------------------------------------
def mgree_reference(params, sequence_output, pieces2word, word_ids, loss_mask):
    hi = jax.lax.Precision.HIGHEST
    min_val = jnp.min(sequence_output)
    expanded = jnp.where(pieces2word[:, :, :, None] > 0,
                         sequence_output[:, None, :, :], min_val)
    wf = jnp.max(expanded, axis=2)
    start = jax.nn.gelu(
        jnp.einsum("bwh,hf->bwf", wf, params["w_start"], precision=hi) + params["b_start"],
        approximate=True)
    end = jax.nn.gelu(
        jnp.einsum("bwh,hf->bwf", wf, params["w_end"], precision=hi) + params["b_end"],
        approximate=True)
    ones = jnp.ones(start.shape[:-1] + (1,), start.dtype)
    x = jnp.concatenate([start, ones], axis=-1)
    y = jnp.concatenate([end, ones], axis=-1)
    s = jnp.einsum("bxi,oij,byj->boxy", x, params["biaffine_w"], y, precision=hi)
    s = jnp.transpose(s, (0, 2, 3, 1))
    m = loss_mask.astype(jnp.float32)[..., None]
    return s * m - (1.0 - m) * 1.0e12


if __name__ == "__main__":
    B, P, W, H = 2, 16, 8, 32
    num_labels, vocab_size = 4, 50

    key = jax.random.PRNGKey(0)
    k_in, k_par, k_ids, k_msk = jax.random.split(key, 4)

    sequence_output = jax.random.normal(k_in, (B, P, H), jnp.float32)

    # pieces2word: word w covers pieces [2w, 2w+1] (every word has >= 1 piece)
    piece_idx = jnp.arange(P)
    word_of_piece = jnp.clip(piece_idx // 2, 0, W - 1)
    p2w_single = jnp.zeros((W, P), jnp.float32).at[word_of_piece, piece_idx].set(1.0)
    pieces2word = jnp.broadcast_to(p2w_single, (B, W, P))

    word_ids = jax.random.randint(k_ids, (B, W), 0, vocab_size)
    loss_mask = (jax.random.uniform(k_msk, (B, W, W)) > 0.2).astype(jnp.float32)

    params = init_params(k_par, H, num_labels, vocab_size)
    prepared = prepare_params(params)

    scores, aux = mgree_forward(prepared, sequence_output, pieces2word, word_ids, loss_mask)
    scores = jax.block_until_ready(scores)

    assert scores.shape == (B, W, W, num_labels), scores.shape
    assert aux == 0

    ref = mgree_reference(params, sequence_output, pieces2word, word_ids, loss_mask)
    ref = jax.block_until_ready(ref)
    # bf16 MXU inputs (weights/activations) introduce ~1% relative error vs the
    # f32 HIGHEST reference; tolerance sized accordingly.
    if not jnp.allclose(scores, ref, rtol=5e-2, atol=1e-2):
        max_err = jnp.max(jnp.abs(scores - ref))
        raise AssertionError(f"Pallas output mismatch vs reference, max abs err = {max_err}")

    print("KERNEL_OK")
</pallas_src>

<mosaic_0001>
module attributes {stable_mosaic.version = 11 : i64} {
  func.func @_word_pool_kernel(%arg0: i32, %arg1: i32, %arg2: memref<1x128x128xi8, #tpu.memory_space<vmem>>, %arg3: memref<1x128x32xf32, #tpu.memory_space<vmem>>, %arg4: memref<1x128x32xbf16, #tpu.memory_space<vmem>>, %arg5: memref<128x32xf32, #tpu.memory_space<vmem>>, %arg6: memref<128x128xf32, #tpu.memory_space<vmem>>) attributes {dimension_semantics = [#tpu.dimension_semantics<parallel>, #tpu.dimension_semantics<arbitrary>], iteration_bounds = array<i64: 2, 1>, scalar_prefetch = 0 : i64, scratch_operands = 2 : i64, tpu.core_type = #tpu.core_type<tc>, window_params = [{transform_indices = @transform_0, window_bounds = array<i64: 1, 128, 128>}, {transform_indices = @transform_1, window_bounds = array<i64: 1, 128, 32>}, {transform_indices = @transform_2, window_bounds = array<i64: 1, 128, 32>}]} {
    %c0_i32 = arith.constant 0 : i32
    %0 = arith.cmpi eq, %arg1, %c0_i32 : i32
    %1 = arith.extui %0 : i1 to i32
    %c0_i32_0 = arith.constant 0 : i32
    %2 = arith.cmpi ne, %1, %c0_i32_0 : i32
    scf.if %2 {
      %cst = arith.constant -3.000000e+04 : f32
      %11 = vector.broadcast %cst : f32 to vector<128x32xf32>
      %c0_9 = arith.constant 0 : index
      %c0_10 = arith.constant 0 : index
      %12 = vector.load %arg5[%c0_9, %c0_10] : memref<128x32xf32, #tpu.memory_space<vmem>>, vector<128x32xf32>
      tpu.vector_store %arg5[%c0_9, %c0_10], %11 {strides = array<i32>} : memref<128x32xf32, #tpu.memory_space<vmem>>, vector<128x32xf32>,
    } else {
    }
    %c0 = arith.constant 0 : index
    %c0_1 = arith.constant 0 : index
    %c0_2 = arith.constant 0 : index
    %3 = vector.load %arg2[%c0, %c0_1, %c0_2] : memref<1x128x128xi8, #tpu.memory_space<vmem>>, vector<1x128x128xi8>
    %4 = vector.shape_cast %3 : vector<1x128x128xi8> to vector<128x128xi8>
    %5 = arith.sitofp %4 : vector<128x128xi8> to vector<128x128xf32>
    %c0_3 = arith.constant 0 : index
    %c0_4 = arith.constant 0 : index
    %6 = vector.load %arg6[%c0_3, %c0_4] : memref<128x128xf32, #tpu.memory_space<vmem>>, vector<128x128xf32>
    tpu.vector_store %arg6[%c0_3, %c0_4], %5 {strides = array<i32>} : memref<128x128xf32, #tpu.memory_space<vmem>>, vector<128x128xf32>,
    %c0_i32_5 = arith.constant 0 : i32
    %c16_i32 = arith.constant 16 : i32
    %7 = arith.addi %c0_i32_5, %c16_i32 : i32
    %c1_i32 = arith.constant 1 : i32
    scf.for %arg7 = %c0_i32_5 to %7 step %c1_i32  : i32 {
      %c8_i32 = arith.constant 8 : i32
      %11 = arith.muli %arg7, %c8_i32 : i32
      %12 = tpu.assume_multiple %11, 8 : i32
      %13 = arith.index_cast %12 : i32 to index
      %c0_9 = arith.constant 0 : index
      %14 = vector.load %arg5[%13, %c0_9] : memref<128x32xf32, #tpu.memory_space<vmem>>, vector<8x32xf32>
      %15 = arith.index_cast %12 : i32 to index
      %c0_10 = arith.constant 0 : index
      %16 = vector.load %arg6[%15, %c0_10] : memref<128x128xf32, #tpu.memory_space<vmem>>, vector<8x128xf32>
      %c0_11 = arith.constant 0 : index
      %c0_12 = arith.constant 0 : index
      %c0_13 = arith.constant 0 : index
      %17 = vector.load %arg3[%c0_11, %c0_12, %c0_13] : memref<1x128x32xf32, #tpu.memory_space<vmem>>, vector<1x8x32xf32>
      %18 = vector.shape_cast %17 : vector<1x8x32xf32> to vector<8x32xf32>
      %19 = vector.extract_strided_slice %16 {offsets = [0, 0], sizes = [8, 8], strides = [1, 1]} : vector<8x128xf32> to vector<8x8xf32>
      %20 = vector.shape_cast %19 : vector<8x8xf32> to vector<8x8x1xf32>
      %cst = arith.constant 0.000000e+00 : f32
      %21 = vector.broadcast %cst : f32 to vector<8x8x1xf32>
      %22 = arith.cmpf ogt, %20, %21 : vector<8x8x1xf32>
      %23 = vector.shape_cast %18 : vector<8x32xf32> to vector<1x8x32xf32>
      %cst_14 = arith.constant -3.000000e+04 : f32
      %24 = vector.shape_cast %22 : vector<8x8x1xi1> to vector<8x8x1xi1>
      %25 = vector.broadcast %24 : vector<8x8x1xi1> to vector<8x8x32xi1>
      %26 = vector.shape_cast %23 : vector<1x8x32xf32> to vector<1x8x32xf32>
      %27 = vector.broadcast %26 : vector<1x8x32xf32> to vector<8x8x32xf32>
      %28 = vector.broadcast %cst_14 : f32 to vector<8x8x32xf32>
      %29 = arith.select %25, %27, %28 : vector<8x8x32xi1>, vector<8x8x32xf32>
      %cst_15 = arith.constant dense<0xFF800000> : vector<8x32xf32>
      %30 = vector.multi_reduction <maximumf>, %29, %cst_15 [1] : vector<8x8x32xf32> to vector<8x32xf32>
      %31 = arith.maximumf %14, %30 : vector<8x32xf32>
      %c0_16 = arith.constant 0 : index
      %c8 = arith.constant 8 : index
      %c0_17 = arith.constant 0 : index
      %32 = vector.load %arg3[%c0_16, %c8, %c0_17] : memref<1x128x32xf32, #tpu.memory_space<vmem>>, vector<1x8x32xf32>
      %33 = vector.shape_cast %32 : vector<1x8x32xf32> to vector<8x32xf32>
      %34 = vector.extract_strided_slice %16 {offsets = [0, 8], sizes = [8, 8], strides = [1, 1]} : vector<8x128xf32> to vector<8x8xf32>
      %35 = vector.shape_cast %34 : vector<8x8xf32> to vector<8x8x1xf32>
      %cst_18 = arith.constant 0.000000e+00 : f32
      %36 = vector.broadcast %cst_18 : f32 to vector<8x8x1xf32>
      %37 = arith.cmpf ogt, %35, %36 : vector<8x8x1xf32>
      %38 = vector.shape_cast %33 : vector<8x32xf32> to vector<1x8x32xf32>
      %cst_19 = arith.constant -3.000000e+04 : f32
      %39 = vector.shape_cast %37 : vector<8x8x1xi1> to vector<8x8x1xi1>
      %40 = vector.broadcast %39 : vector<8x8x1xi1> to vector<8x8x32xi1>
      %41 = vector.shape_cast %38 : vector<1x8x32xf32> to vector<1x8x32xf32>
      %42 = vector.broadcast %41 : vector<1x8x32xf32> to vector<8x8x32xf32>
      %43 = vector.broadcast %cst_19 : f32 to vector<8x8x32xf32>
      %44 = arith.select %40, %42, %43 : vector<8x8x32xi1>, vector<8x8x32xf32>
      %cst_20 = arith.constant dense<0xFF800000> : vector<8x32xf32>
      %45 = vector.multi_reduction <maximumf>, %44, %cst_20 [1] : vector<8x8x32xf32> to vector<8x32xf32>
      %46 = arith.maximumf %31, %45 : vector<8x32xf32>
      %c0_21 = arith.constant 0 : index
      %c16 = arith.constant 16 : index
      %c0_22 = arith.constant 0 : index
      %47 = vector.load %arg3[%c0_21, %c16, %c0_22] : memref<1x128x32xf32, #tpu.memory_space<vmem>>, vector<1x8x32xf32>
      %48 = vector.shape_cast %47 : vector<1x8x32xf32> to vector<8x32xf32>
      %49 = vector.extract_strided_slice %16 {offsets = [0, 16], sizes = [8, 8], strides = [1, 1]} : vector<8x128xf32> to vector<8x8xf32>
      %50 = vector.shape_cast %49 : vector<8x8xf32> to vector<8x8x1xf32>
      %cst_23 = arith.constant 0.000000e+00 : f32
      %51 = vector.broadcast %cst_23 : f32 to vector<8x8x1xf32>
      %52 = arith.cmpf ogt, %50, %51 : vector<8x8x1xf32>
      %53 = vector.shape_cast %48 : vector<8x32xf32> to vector<1x8x32xf32>
      %cst_24 = arith.constant -3.000000e+04 : f32
      %54 = vector.shape_cast %52 : vector<8x8x1xi1> to vector<8x8x1xi1>
      %55 = vector.broadcast %54 : vector<8x8x1xi1> to vector<8x8x32xi1>
      %56 = vector.shape_cast %53 : vector<1x8x32xf32> to vector<1x8x32xf32>
      %57 = vector.broadcast %56 : vector<1x8x32xf32> to vector<8x8x32xf32>
      %58 = vector.broadcast %cst_24 : f32 to vector<8x8x32xf32>
      %59 = arith.select %55, %57, %58 : vector<8x8x32xi1>, vector<8x8x32xf32>
      %cst_25 = arith.constant dense<0xFF800000> : vector<8x32xf32>
      %60 = vector.multi_reduction <maximumf>, %59, %cst_25 [1] : vector<8x8x32xf32> to vector<8x32xf32>
      %61 = arith.maximumf %46, %60 : vector<8x32xf32>
      %c0_26 = arith.constant 0 : index
      %c24 = arith.constant 24 : index
      %c0_27 = arith.constant 0 : index
      %62 = vector.load %arg3[%c0_26, %c24, %c0_27] : memref<1x128x32xf32, #tpu.memory_space<vmem>>, vector<1x8x32xf32>
      %63 = vector.shape_cast %62 : vector<1x8x32xf32> to vector<8x32xf32>
      %64 = vector.extract_strided_slice %16 {offsets = [0, 24], sizes = [8, 8], strides = [1, 1]} : vector<8x128xf32> to vector<8x8xf32>
      %65 = vector.shape_cast %64 : vector<8x8xf32> to vector<8x8x1xf32>
      %cst_28 = arith.constant 0.000000e+00 : f32
      %66 = vector.broadcast %cst_28 : f32 to vector<8x8x1xf32>
      %67 = arith.cmpf ogt, %65, %66 : vector<8x8x1xf32>
      %68 = vector.shape_cast %63 : vector<8x32xf32> to vector<1x8x32xf32>
      %cst_29 = arith.constant -3.000000e+04 : f32
      %69 = vector.shape_cast %67 : vector<8x8x1xi1> to vector<8x8x1xi1>
      %70 = vector.broadcast %69 : vector<8x8x1xi1> to vector<8x8x32xi1>
      %71 = vector.shape_cast %68 : vector<1x8x32xf32> to vector<1x8x32xf32>
      %72 = vector.broadcast %71 : vector<1x8x32xf32> to vector<8x8x32xf32>
      %73 = vector.broadcast %cst_29 : f32 to vector<8x8x32xf32>
      %74 = arith.select %70, %72, %73 : vector<8x8x32xi1>, vector<8x8x32xf32>
      %cst_30 = arith.constant dense<0xFF800000> : vector<8x32xf32>
      %75 = vector.multi_reduction <maximumf>, %74, %cst_30 [1] : vector<8x8x32xf32> to vector<8x32xf32>
      %76 = arith.maximumf %61, %75 : vector<8x32xf32>
      %c0_31 = arith.constant 0 : index
      %c32 = arith.constant 32 : index
      %c0_32 = arith.constant 0 : index
      %77 = vector.load %arg3[%c0_31, %c32, %c0_32] : memref<1x128x32xf32, #tpu.memory_space<vmem>>, vector<1x8x32xf32>
      %78 = vector.shape_cast %77 : vector<1x8x32xf32> to vector<8x32xf32>
      %79 = vector.extract_strided_slice %16 {offsets = [0, 32], sizes = [8, 8], strides = [1, 1]} : vector<8x128xf32> to vector<8x8xf32>
      %80 = vector.shape_cast %79 : vector<8x8xf32> to vector<8x8x1xf32>
      %cst_33 = arith.constant 0.000000e+00 : f32
      %81 = vector.broadcast %cst_33 : f32 to vector<8x8x1xf32>
      %82 = arith.cmpf ogt, %80, %81 : vector<8x8x1xf32>
      %83 = vector.shape_cast %78 : vector<8x32xf32> to vector<1x8x32xf32>
      %cst_34 = arith.constant -3.000000e+04 : f32
      %84 = vector.shape_cast %82 : vector<8x8x1xi1> to vector<8x8x1xi1>
      %85 = vector.broadcast %84 : vector<8x8x1xi1> to vector<8x8x32xi1>
      %86 = vector.shape_cast %83 : vector<1x8x32xf32> to vector<1x8x32xf32>
      %87 = vector.broadcast %86 : vector<1x8x32xf32> to vector<8x8x32xf32>
      %88 = vector.broadcast %cst_34 : f32 to vector<8x8x32xf32>
      %89 = arith.select %85, %87, %88 : vector<8x8x32xi1>, vector<8x8x32xf32>
      %cst_35 = arith.constant dense<0xFF800000> : vector<8x32xf32>
      %90 = vector.multi_reduction <maximumf>, %89, %cst_35 [1] : vector<8x8x32xf32> to vector<8x32xf32>
      %91 = arith.maximumf %76, %90 : vector<8x32xf32>
      %c0_36 = arith.constant 0 : index
      %c40 = arith.constant 40 : index
      %c0_37 = arith.constant 0 : index
      %92 = vector.load %arg3[%c0_36, %c40, %c0_37] : memref<1x128x32xf32, #tpu.memory_space<vmem>>, vector<1x8x32xf32>
      %93 = vector.shape_cast %92 : vector<1x8x32xf32> to vector<8x32xf32>
      %94 = vector.extract_strided_slice %16 {offsets = [0, 40], sizes = [8, 8], strides = [1, 1]} : vector<8x128xf32> to vector<8x8xf32>
      %95 = vector.shape_cast %94 : vector<8x8xf32> to vector<8x8x1xf32>
      %cst_38 = arith.constant 0.000000e+00 : f32
      %96 = vector.broadcast %cst_38 : f32 to vector<8x8x1xf32>
      %97 = arith.cmpf ogt, %95, %96 : vector<8x8x1xf32>
      %98 = vector.shape_cast %93 : vector<8x32xf32> to vector<1x8x32xf32>
      %cst_39 = arith.constant -3.000000e+04 : f32
      %99 = vector.shape_cast %97 : vector<8x8x1xi1> to vector<8x8x1xi1>
      %100 = vector.broadcast %99 : vector<8x8x1xi1> to vector<8x8x32xi1>
      %101 = vector.shape_cast %98 : vector<1x8x32xf32> to vector<1x8x32xf32>
      %102 = vector.broadcast %101 : vector<1x8x32xf32> to vector<8x8x32xf32>
      %103 = vector.broadcast %cst_39 : f32 to vector<8x8x32xf32>
      %104 = arith.select %100, %102, %103 : vector<8x8x32xi1>, vector<8x8x32xf32>
      %cst_40 = arith.constant dense<0xFF800000> : vector<8x32xf32>
      %105 = vector.multi_reduction <maximumf>, %104, %cst_40 [1] : vector<8x8x32xf32> to vector<8x32xf32>
      %106 = arith.maximumf %91, %105 : vector<8x32xf32>
      %c0_41 = arith.constant 0 : index
      %c48 = arith.constant 48 : index
      %c0_42 = arith.constant 0 : index
      %107 = vector.load %arg3[%c0_41, %c48, %c0_42] : memref<1x128x32xf32, #tpu.memory_space<vmem>>, vector<1x8x32xf32>
      %108 = vector.shape_cast %107 : vector<1x8x32xf32> to vector<8x32xf32>
      %109 = vector.extract_strided_slice %16 {offsets = [0, 48], sizes = [8, 8], strides = [1, 1]} : vector<8x128xf32> to vector<8x8xf32>
      %110 = vector.shape_cast %109 : vector<8x8xf32> to vector<8x8x1xf32>
      %cst_43 = arith.constant 0.000000e+00 : f32
      %111 = vector.broadcast %cst_43 : f32 to vector<8x8x1xf32>
      %112 = arith.cmpf ogt, %110, %111 : vector<8x8x1xf32>
      %113 = vector.shape_cast %108 : vector<8x32xf32> to vector<1x8x32xf32>
      %cst_44 = arith.constant -3.000000e+04 : f32
      %114 = vector.shape_cast %112 : vector<8x8x1xi1> to vector<8x8x1xi1>
      %115 = vector.broadcast %114 : vector<8x8x1xi1> to vector<8x8x32xi1>
      %116 = vector.shape_cast %113 : vector<1x8x32xf32> to vector<1x8x32xf32>
      %117 = vector.broadcast %116 : vector<1x8x32xf32> to vector<8x8x32xf32>
      %118 = vector.broadcast %cst_44 : f32 to vector<8x8x32xf32>
      %119 = arith.select %115, %117, %118 : vector<8x8x32xi1>, vector<8x8x32xf32>
      %cst_45 = arith.constant dense<0xFF800000> : vector<8x32xf32>
      %120 = vector.multi_reduction <maximumf>, %119, %cst_45 [1] : vector<8x8x32xf32> to vector<8x32xf32>
      %121 = arith.maximumf %106, %120 : vector<8x32xf32>
      %c0_46 = arith.constant 0 : index
      %c56 = arith.constant 56 : index
      %c0_47 = arith.constant 0 : index
      %122 = vector.load %arg3[%c0_46, %c56, %c0_47] : memref<1x128x32xf32, #tpu.memory_space<vmem>>, vector<1x8x32xf32>
      %123 = vector.shape_cast %122 : vector<1x8x32xf32> to vector<8x32xf32>
      %124 = vector.extract_strided_slice %16 {offsets = [0, 56], sizes = [8, 8], strides = [1, 1]} : vector<8x128xf32> to vector<8x8xf32>
      %125 = vector.shape_cast %124 : vector<8x8xf32> to vector<8x8x1xf32>
      %cst_48 = arith.constant 0.000000e+00 : f32
      %126 = vector.broadcast %cst_48 : f32 to vector<8x8x1xf32>
      %127 = arith.cmpf ogt, %125, %126 : vector<8x8x1xf32>
      %128 = vector.shape_cast %123 : vector<8x32xf32> to vector<1x8x32xf32>
      %cst_49 = arith.constant -3.000000e+04 : f32
      %129 = vector.shape_cast %127 : vector<8x8x1xi1> to vector<8x8x1xi1>
      %130 = vector.broadcast %129 : vector<8x8x1xi1> to vector<8x8x32xi1>
      %131 = vector.shape_cast %128 : vector<1x8x32xf32> to vector<1x8x32xf32>
      %132 = vector.broadcast %131 : vector<1x8x32xf32> to vector<8x8x32xf32>
      %133 = vector.broadcast %cst_49 : f32 to vector<8x8x32xf32>
      %134 = arith.select %130, %132, %133 : vector<8x8x32xi1>, vector<8x8x32xf32>
      %cst_50 = arith.constant dense<0xFF800000> : vector<8x32xf32>
      %135 = vector.multi_reduction <maximumf>, %134, %cst_50 [1] : vector<8x8x32xf32> to vector<8x32xf32>
      %136 = arith.maximumf %121, %135 : vector<8x32xf32>
      %c0_51 = arith.constant 0 : index
      %c64 = arith.constant 64 : index
      %c0_52 = arith.constant 0 : index
      %137 = vector.load %arg3[%c0_51, %c64, %c0_52] : memref<1x128x32xf32, #tpu.memory_space<vmem>>, vector<1x8x32xf32>
      %138 = vector.shape_cast %137 : vector<1x8x32xf32> to vector<8x32xf32>
      %139 = vector.extract_strided_slice %16 {offsets = [0, 64], sizes = [8, 8], strides = [1, 1]} : vector<8x128xf32> to vector<8x8xf32>
      %140 = vector.shape_cast %139 : vector<8x8xf32> to vector<8x8x1xf32>
      %cst_53 = arith.constant 0.000000e+00 : f32
      %141 = vector.broadcast %cst_53 : f32 to vector<8x8x1xf32>
      %142 = arith.cmpf ogt, %140, %141 : vector<8x8x1xf32>
      %143 = vector.shape_cast %138 : vector<8x32xf32> to vector<1x8x32xf32>
      %cst_54 = arith.constant -3.000000e+04 : f32
      %144 = vector.shape_cast %142 : vector<8x8x1xi1> to vector<8x8x1xi1>
      %145 = vector.broadcast %144 : vector<8x8x1xi1> to vector<8x8x32xi1>
      %146 = vector.shape_cast %143 : vector<1x8x32xf32> to vector<1x8x32xf32>
      %147 = vector.broadcast %146 : vector<1x8x32xf32> to vector<8x8x32xf32>
      %148 = vector.broadcast %cst_54 : f32 to vector<8x8x32xf32>
      %149 = arith.select %145, %147, %148 : vector<8x8x32xi1>, vector<8x8x32xf32>
      %cst_55 = arith.constant dense<0xFF800000> : vector<8x32xf32>
      %150 = vector.multi_reduction <maximumf>, %149, %cst_55 [1] : vector<8x8x32xf32> to vector<8x32xf32>
      %151 = arith.maximumf %136, %150 : vector<8x32xf32>
      %c0_56 = arith.constant 0 : index
      %c72 = arith.constant 72 : index
      %c0_57 = arith.constant 0 : index
      %152 = vector.load %arg3[%c0_56, %c72, %c0_57] : memref<1x128x32xf32, #tpu.memory_space<vmem>>, vector<1x8x32xf32>
      %153 = vector.shape_cast %152 : vector<1x8x32xf32> to vector<8x32xf32>
      %154 = vector.extract_strided_slice %16 {offsets = [0, 72], sizes = [8, 8], strides = [1, 1]} : vector<8x128xf32> to vector<8x8xf32>
      %155 = vector.shape_cast %154 : vector<8x8xf32> to vector<8x8x1xf32>
      %cst_58 = arith.constant 0.000000e+00 : f32
      %156 = vector.broadcast %cst_58 : f32 to vector<8x8x1xf32>
      %157 = arith.cmpf ogt, %155, %156 : vector<8x8x1xf32>
      %158 = vector.shape_cast %153 : vector<8x32xf32> to vector<1x8x32xf32>
      %cst_59 = arith.constant -3.000000e+04 : f32
      %159 = vector.shape_cast %157 : vector<8x8x1xi1> to vector<8x8x1xi1>
      %160 = vector.broadcast %159 : vector<8x8x1xi1> to vector<8x8x32xi1>
      %161 = vector.shape_cast %158 : vector<1x8x32xf32> to vector<1x8x32xf32>
      %162 = vector.broadcast %161 : vector<1x8x32xf32> to vector<8x8x32xf32>
      %163 = vector.broadcast %cst_59 : f32 to vector<8x8x32xf32>
      %164 = arith.select %160, %162, %163 : vector<8x8x32xi1>, vector<8x8x32xf32>
      %cst_60 = arith.constant dense<0xFF800000> : vector<8x32xf32>
      %165 = vector.multi_reduction <maximumf>, %164, %cst_60 [1] : vector<8x8x32xf32> to vector<8x32xf32>
      %166 = arith.maximumf %151, %165 : vector<8x32xf32>
      %c0_61 = arith.constant 0 : index
      %c80 = arith.constant 80 : index
      %c0_62 = arith.constant 0 : index
      %167 = vector.load %arg3[%c0_61, %c80, %c0_62] : memref<1x128x32xf32, #tpu.memory_space<vmem>>, vector<1x8x32xf32>
      %168 = vector.shape_cast %167 : vector<1x8x32xf32> to vector<8x32xf32>
      %169 = vector.extract_strided_slice %16 {offsets = [0, 80], sizes = [8, 8], strides = [1, 1]} : vector<8x128xf32> to vector<8x8xf32>
      %170 = vector.shape_cast %169 : vector<8x8xf32> to vector<8x8x1xf32>
      %cst_63 = arith.constant 0.000000e+00 : f32
      %171 = vector.broadcast %cst_63 : f32 to vector<8x8x1xf32>
      %172 = arith.cmpf ogt, %170, %171 : vector<8x8x1xf32>
      %173 = vector.shape_cast %168 : vector<8x32xf32> to vector<1x8x32xf32>
      %cst_64 = arith.constant -3.000000e+04 : f32
      %174 = vector.shape_cast %172 : vector<8x8x1xi1> to vector<8x8x1xi1>
      %175 = vector.broadcast %174 : vector<8x8x1xi1> to vector<8x8x32xi1>
      %176 = vector.shape_cast %173 : vector<1x8x32xf32> to vector<1x8x32xf32>
      %177 = vector.broadcast %176 : vector<1x8x32xf32> to vector<8x8x32xf32>
      %178 = vector.broadcast %cst_64 : f32 to vector<8x8x32xf32>
      %179 = arith.select %175, %177, %178 : vector<8x8x32xi1>, vector<8x8x32xf32>
      %cst_65 = arith.constant dense<0xFF800000> : vector<8x32xf32>
      %180 = vector.multi_reduction <maximumf>, %179, %cst_65 [1] : vector<8x8x32xf32> to vector<8x32xf32>
      %181 = arith.maximumf %166, %180 : vector<8x32xf32>
      %c0_66 = arith.constant 0 : index
      %c88 = arith.constant 88 : index
      %c0_67 = arith.constant 0 : index
      %182 = vector.load %arg3[%c0_66, %c88, %c0_67] : memref<1x128x32xf32, #tpu.memory_space<vmem>>, vector<1x8x32xf32>
      %183 = vector.shape_cast %182 : vector<1x8x32xf32> to vector<8x32xf32>
      %184 = vector.extract_strided_slice %16 {offsets = [0, 88], sizes = [8, 8], strides = [1, 1]} : vector<8x128xf32> to vector<8x8xf32>
      %185 = vector.shape_cast %184 : vector<8x8xf32> to vector<8x8x1xf32>
      %cst_68 = arith.constant 0.000000e+00 : f32
      %186 = vector.broadcast %cst_68 : f32 to vector<8x8x1xf32>
      %187 = arith.cmpf ogt, %185, %186 : vector<8x8x1xf32>
      %188 = vector.shape_cast %183 : vector<8x32xf32> to vector<1x8x32xf32>
      %cst_69 = arith.constant -3.000000e+04 : f32
      %189 = vector.shape_cast %187 : vector<8x8x1xi1> to vector<8x8x1xi1>
      %190 = vector.broadcast %189 : vector<8x8x1xi1> to vector<8x8x32xi1>
      %191 = vector.shape_cast %188 : vector<1x8x32xf32> to vector<1x8x32xf32>
      %192 = vector.broadcast %191 : vector<1x8x32xf32> to vector<8x8x32xf32>
      %193 = vector.broadcast %cst_69 : f32 to vector<8x8x32xf32>
      %194 = arith.select %190, %192, %193 : vector<8x8x32xi1>, vector<8x8x32xf32>
      %cst_70 = arith.constant dense<0xFF800000> : vector<8x32xf32>
      %195 = vector.multi_reduction <maximumf>, %194, %cst_70 [1] : vector<8x8x32xf32> to vector<8x32xf32>
      %196 = arith.maximumf %181, %195 : vector<8x32xf32>
      %c0_71 = arith.constant 0 : index
      %c96 = arith.constant 96 : index
      %c0_72 = arith.constant 0 : index
      %197 = vector.load %arg3[%c0_71, %c96, %c0_72] : memref<1x128x32xf32, #tpu.memory_space<vmem>>, vector<1x8x32xf32>
      %198 = vector.shape_cast %197 : vector<1x8x32xf32> to vector<8x32xf32>
      %199 = vector.extract_strided_slice %16 {offsets = [0, 96], sizes = [8, 8], strides = [1, 1]} : vector<8x128xf32> to vector<8x8xf32>
      %200 = vector.shape_cast %199 : vector<8x8xf32> to vector<8x8x1xf32>
      %cst_73 = arith.constant 0.000000e+00 : f32
      %201 = vector.broadcast %cst_73 : f32 to vector<8x8x1xf32>
      %202 = arith.cmpf ogt, %200, %201 : vector<8x8x1xf32>
      %203 = vector.shape_cast %198 : vector<8x32xf32> to vector<1x8x32xf32>
      %cst_74 = arith.constant -3.000000e+04 : f32
      %204 = vector.shape_cast %202 : vector<8x8x1xi1> to vector<8x8x1xi1>
      %205 = vector.broadcast %204 : vector<8x8x1xi1> to vector<8x8x32xi1>
      %206 = vector.shape_cast %203 : vector<1x8x32xf32> to vector<1x8x32xf32>
      %207 = vector.broadcast %206 : vector<1x8x32xf32> to vector<8x8x32xf32>
      %208 = vector.broadcast %cst_74 : f32 to vector<8x8x32xf32>
      %209 = arith.select %205, %207, %208 : vector<8x8x32xi1>, vector<8x8x32xf32>
      %cst_75 = arith.constant dense<0xFF800000> : vector<8x32xf32>
      %210 = vector.multi_reduction <maximumf>, %209, %cst_75 [1] : vector<8x8x32xf32> to vector<8x32xf32>
      %211 = arith.maximumf %196, %210 : vector<8x32xf32>
      %c0_76 = arith.constant 0 : index
      %c104 = arith.constant 104 : index
      %c0_77 = arith.constant 0 : index
      %212 = vector.load %arg3[%c0_76, %c104, %c0_77] : memref<1x128x32xf32, #tpu.memory_space<vmem>>, vector<1x8x32xf32>
      %213 = vector.shape_cast %212 : vector<1x8x32xf32> to vector<8x32xf32>
      %214 = vector.extract_strided_slice %16 {offsets = [0, 104], sizes = [8, 8], strides = [1, 1]} : vector<8x128xf32> to vector<8x8xf32>
      %215 = vector.shape_cast %214 : vector<8x8xf32> to vector<8x8x1xf32>
      %cst_78 = arith.constant 0.000000e+00 : f32
      %216 = vector.broadcast %cst_78 : f32 to vector<8x8x1xf32>
      %217 = arith.cmpf ogt, %215, %216 : vector<8x8x1xf32>
      %218 = vector.shape_cast %213 : vector<8x32xf32> to vector<1x8x32xf32>
      %cst_79 = arith.constant -3.000000e+04 : f32
      %219 = vector.shape_cast %217 : vector<8x8x1xi1> to vector<8x8x1xi1>
      %220 = vector.broadcast %219 : vector<8x8x1xi1> to vector<8x8x32xi1>
      %221 = vector.shape_cast %218 : vector<1x8x32xf32> to vector<1x8x32xf32>
      %222 = vector.broadcast %221 : vector<1x8x32xf32> to vector<8x8x32xf32>
      %223 = vector.broadcast %cst_79 : f32 to vector<8x8x32xf32>
      %224 = arith.select %220, %222, %223 : vector<8x8x32xi1>, vector<8x8x32xf32>
      %cst_80 = arith.constant dense<0xFF800000> : vector<8x32xf32>
      %225 = vector.multi_reduction <maximumf>, %224, %cst_80 [1] : vector<8x8x32xf32> to vector<8x32xf32>
      %226 = arith.maximumf %211, %225 : vector<8x32xf32>
      %c0_81 = arith.constant 0 : index
      %c112 = arith.constant 112 : index
      %c0_82 = arith.constant 0 : index
      %227 = vector.load %arg3[%c0_81, %c112, %c0_82] : memref<1x128x32xf32, #tpu.memory_space<vmem>>, vector<1x8x32xf32>
      %228 = vector.shape_cast %227 : vector<1x8x32xf32> to vector<8x32xf32>
      %229 = vector.extract_strided_slice %16 {offsets = [0, 112], sizes = [8, 8], strides = [1, 1]} : vector<8x128xf32> to vector<8x8xf32>
      %230 = vector.shape_cast %229 : vector<8x8xf32> to vector<8x8x1xf32>
      %cst_83 = arith.constant 0.000000e+00 : f32
      %231 = vector.broadcast %cst_83 : f32 to vector<8x8x1xf32>
      %232 = arith.cmpf ogt, %230, %231 : vector<8x8x1xf32>
      %233 = vector.shape_cast %228 : vector<8x32xf32> to vector<1x8x32xf32>
      %cst_84 = arith.constant -3.000000e+04 : f32
      %234 = vector.shape_cast %232 : vector<8x8x1xi1> to vector<8x8x1xi1>
      %235 = vector.broadcast %234 : vector<8x8x1xi1> to vector<8x8x32xi1>
      %236 = vector.shape_cast %233 : vector<1x8x32xf32> to vector<1x8x32xf32>
      %237 = vector.broadcast %236 : vector<1x8x32xf32> to vector<8x8x32xf32>
      %238 = vector.broadcast %cst_84 : f32 to vector<8x8x32xf32>
      %239 = arith.select %235, %237, %238 : vector<8x8x32xi1>, vector<8x8x32xf32>
      %cst_85 = arith.constant dense<0xFF800000> : vector<8x32xf32>
      %240 = vector.multi_reduction <maximumf>, %239, %cst_85 [1] : vector<8x8x32xf32> to vector<8x32xf32>
      %241 = arith.maximumf %226, %240 : vector<8x32xf32>
      %c0_86 = arith.constant 0 : index
      %c120 = arith.constant 120 : index
      %c0_87 = arith.constant 0 : index
      %242 = vector.load %arg3[%c0_86, %c120, %c0_87] : memref<1x128x32xf32, #tpu.memory_space<vmem>>, vector<1x8x32xf32>
      %243 = vector.shape_cast %242 : vector<1x8x32xf32> to vector<8x32xf32>
      %244 = vector.extract_strided_slice %16 {offsets = [0, 120], sizes = [8, 8], strides = [1, 1]} : vector<8x128xf32> to vector<8x8xf32>
      %245 = vector.shape_cast %244 : vector<8x8xf32> to vector<8x8x1xf32>
      %cst_88 = arith.constant 0.000000e+00 : f32
      %246 = vector.broadcast %cst_88 : f32 to vector<8x8x1xf32>
      %247 = arith.cmpf ogt, %245, %246 : vector<8x8x1xf32>
      %248 = vector.shape_cast %243 : vector<8x32xf32> to vector<1x8x32xf32>
      %cst_89 = arith.constant -3.000000e+04 : f32
      %249 = vector.shape_cast %247 : vector<8x8x1xi1> to vector<8x8x1xi1>
      %250 = vector.broadcast %249 : vector<8x8x1xi1> to vector<8x8x32xi1>
      %251 = vector.shape_cast %248 : vector<1x8x32xf32> to vector<1x8x32xf32>
      %252 = vector.broadcast %251 : vector<1x8x32xf32> to vector<8x8x32xf32>
      %253 = vector.broadcast %cst_89 : f32 to vector<8x8x32xf32>
      %254 = arith.select %250, %252, %253 : vector<8x8x32xi1>, vector<8x8x32xf32>
      %cst_90 = arith.constant dense<0xFF800000> : vector<8x32xf32>
      %255 = vector.multi_reduction <maximumf>, %254, %cst_90 [1] : vector<8x8x32xf32> to vector<8x32xf32>
      %256 = arith.maximumf %241, %255 : vector<8x32xf32>
      %257 = arith.index_cast %12 : i32 to index
      %c0_91 = arith.constant 0 : index
      %258 = vector.load %arg5[%257, %c0_91] : memref<128x32xf32, #tpu.memory_space<vmem>>, vector<8x32xf32>
      tpu.vector_store %arg5[%257, %c0_91], %256 {strides = array<i32>} : memref<128x32xf32, #tpu.memory_space<vmem>>, vector<8x32xf32>,
    }
    %c16_i32_6 = arith.constant 16 : i32
    %c0_i32_7 = arith.constant 0 : i32
    %8 = arith.cmpi eq, %arg1, %c0_i32_7 : i32
    %9 = arith.extui %8 : i1 to i32
    %c0_i32_8 = arith.constant 0 : i32
    %10 = arith.cmpi ne, %9, %c0_i32_8 : i32
    scf.if %10 {
      %c0_9 = arith.constant 0 : index
      %c0_10 = arith.constant 0 : index
      %11 = vector.load %arg5[%c0_9, %c0_10] : memref<128x32xf32, #tpu.memory_space<vmem>>, vector<128x32xf32>
      %12 = arith.truncf %11 : vector<128x32xf32> to vector<128x32xbf16>
      %c0_11 = arith.constant 0 : index
      %c0_12 = arith.constant 0 : index
      %c0_13 = arith.constant 0 : index
      %13 = vector.load %arg4[%c0_11, %c0_12, %c0_13] : memref<1x128x32xbf16, #tpu.memory_space<vmem>>, vector<1x128x32xbf16>
      %14 = vector.shape_cast %13 : vector<1x128x32xbf16> to vector<128x32xbf16>
      %15 = vector.shape_cast %12 : vector<128x32xbf16> to vector<1x128x32xbf16>
      tpu.vector_store %arg4[%c0_11, %c0_12, %c0_13], %15 {strides = array<i32>} : memref<1x128x32xbf16, #tpu.memory_space<vmem>>, vector<1x128x32xbf16>,
    } else {
    }
    return
  }
  func.func @transform_0(%arg0: i32, %arg1: i32) -> (i32, i32, i32) {
    %c0_i32 = arith.constant 0 : i32
    %c0_i32_0 = arith.constant 0 : i32
    return %arg0, %c0_i32, %arg1 : i32, i32, i32
  }
  func.func @transform_1(%arg0: i32, %arg1: i32) -> (i32, i32, i32) {
    %c0_i32 = arith.constant 0 : i32
    %c0_i32_0 = arith.constant 0 : i32
    return %arg0, %arg1, %c0_i32 : i32, i32, i32
  }
  func.func @transform_2(%arg0: i32, %arg1: i32) -> (i32, i32, i32) {
    %c0_i32 = arith.constant 0 : i32
    %c0_i32_0 = arith.constant 0 : i32
    %c0_i32_1 = arith.constant 0 : i32
    return %arg0, %c0_i32, %c0_i32_0 : i32, i32, i32
  }
}

</mosaic_0001>

<llo_original>
// kernel: tpu_custom_call.1
$region0: #{tpu_custom_call.1}
  #allocation0 [shape = 'u32[]', space=smem, size = 0x4, offset = 0x4, fixed_abs, tag = 'smem constant byte address 0x4 - core index']
  #allocation1 [shape = 'u32[144,128]{1,0:T(1,128)}', space=vmem, size = 0x12000, scoped, tag = 'internal scratch']
  #allocation2 [shape = 'f32[128,32]{1,0:T(8,128)}', space=vmem, size = 0x10000, scoped, tag = 'scratch operand']
  #allocation3 [shape = 'f32[128,128]{1,0:T(8,128)}', space=vmem, size = 0x10000, scoped, tag = 'scratch operand']
  %s0 = inlined_call_operand.vmem [shape: s8[2,128,128], index: 0, kind: input, shape index: {}]
  %s1 = inlined_call_operand.vmem [shape: f32[2,128,32], index: 1, kind: input, shape index: {}]
  %s2 = inlined_call_operand.vmem [shape: bf16[2,128,32], index: 2, kind: output, shape index: {}]
  %s3 = sld [smem:[#allocation0]]
  $region56: #{tpu_custom_call.1} parent=0
    _
  %s5 = ssub.s32 1, %s3
  %s6 = scalar_select 0, %s5, %s3
  loop: start=0, step=1, limit=4
  $region2: #{tpu_custom_call.1} parent=0 // loop_pre_header
    _
  $region3: #{tpu_custom_call.1} parent=0 // loop_header
    %s8 = sphi 0, %s12
    %p9 = scmp.ge.s32.totalorder %s8, 4
    %s15 = sphi 0, %s27
    %s16 = sphi 0, %s23
    %s17 = sphi 0, %s15
    %s18 = sphi 0, %s16
    %s19 = sphi 0, %s17
    %s20 = sphi 0, %s18
    %s32 = sphi 0, %s34
    %s35 = sphi 0, %s32
    %s36 = sphi 0, %s35
    %s52 = sphi 0, %s36
    %s60 = sphi 0, %s62
    %s63 = sphi 0, %s60
    %s64 = sphi 0, %s63
    %s80 = sphi 0, %s64
    %s86 = sphi 0, %s88
    %s89 = sphi 0, %s86
    %s90 = sphi 0, %s89
    %s106 = sphi 0, %s90
  $region4: #{tpu_custom_call.1} parent=0 // loop_header_branch
    %11 = sbr.rel (%p9) target = $region8
  $region5: #{tpu_custom_call.1} parent=0 // loop_body
    %s13 = ssub.s32 %s8, 1
    %s14 = ssub.s32 %s8, 2
    %s21 = sadd.s32 1, %s16
    %p22 = scmp.ge.s32.totalorder %s21, 1
    %s23 = scalar_select %p22, 0, %s21
    %s24 = sadd.s32 1, %s15
    %s25 = scalar_select %p22, %s24, %s15
    %p26 = scmp.ge.s32.totalorder %s25, 2
    %s27 = scalar_select %p26, 0, %s25
    %s28 = ssub.s32 %s15, %s27
    %s29 = ssub.s32 %s16, %s23
    %s30 = sor.u32 %s28, %s29
    %p31 = scmp.eq.s32.totalorder %s30, 0
    %s33 = sadd.s32 %s32, 1
    %s34 = scalar_select %p31, %s32, %s33
    %p37 = pneg %p31
    %p38 = scmp.eq.s32.totalorder %s8, 1
    %p39 = por %p37, %p38
    %p40 = scmp.ne.s32.totalorder %s32, %s35
    %p41 = scmp.eq.s32.totalorder %s8, 0
    %p42 = por %p40, %p41
    %p43 = scmp.ne.s32.totalorder %s32, %s35
    %p44 = scmp.eq.s32.totalorder %s13, 1
    %p45 = por %p43, %p44
    %p46 = scmp.ne.s32.totalorder %s35, %s36
    %p47 = scmp.eq.s32.totalorder %s13, 0
    %p48 = por %p46, %p47
    %p49 = scmp.ne.s32.totalorder %s35, %s36
    %p50 = scmp.eq.s32.totalorder %s14, 1
    %p51 = por %p49, %p50
    %p53 = scmp.ne.s32.totalorder %s36, %s52
    %p54 = scmp.eq.s32.totalorder %s14, 0
    %p55 = por %p53, %p54
    %s56 = ssub.s32 %s15, %s27
    %s57 = ssub.s32 %s16, %s23
    %s58 = sor.u32 %s56, %s57
    %p59 = scmp.eq.s32.totalorder %s58, 0
    %s61 = sadd.s32 %s60, 1
    %s62 = scalar_select %p59, %s60, %s61
    %p65 = pneg %p59
    %p66 = scmp.eq.s32.totalorder %s8, 1
    %p67 = por %p65, %p66
    %p68 = scmp.ne.s32.totalorder %s60, %s63
    %p69 = scmp.eq.s32.totalorder %s8, 0
    %p70 = por %p68, %p69
    %p71 = scmp.ne.s32.totalorder %s60, %s63
    %p72 = scmp.eq.s32.totalorder %s13, 1
    %p73 = por %p71, %p72
    %p74 = scmp.ne.s32.totalorder %s63, %s64
    %p75 = scmp.eq.s32.totalorder %s13, 0
    %p76 = por %p74, %p75
    %p77 = scmp.ne.s32.totalorder %s63, %s64
    %p78 = scmp.eq.s32.totalorder %s14, 1
    %p79 = por %p77, %p78
    %p81 = scmp.ne.s32.totalorder %s64, %s80
    %p82 = scmp.eq.s32.totalorder %s14, 0
    %p83 = por %p81, %p82
    %s84 = ssub.s32 %s15, %s27
    %p85 = scmp.eq.s32.totalorder %s84, 0
    %s87 = sadd.s32 %s86, 1
    %s88 = scalar_select %p85, %s86, %s87
    %p91 = pneg %p85
    %p92 = scmp.eq.s32.totalorder %s8, 1
    %p93 = por %p91, %p92
    %p94 = scmp.ne.s32.totalorder %s86, %s89
    %p95 = scmp.eq.s32.totalorder %s8, 0
    %p96 = por %p94, %p95
    %p97 = scmp.ne.s32.totalorder %s86, %s89
    %p98 = scmp.eq.s32.totalorder %s13, 1
    %p99 = por %p97, %p98
    %p100 = scmp.ne.s32.totalorder %s89, %s90
    %p101 = scmp.eq.s32.totalorder %s13, 0
    %p102 = por %p100, %p101
    %p103 = scmp.ne.s32.totalorder %s89, %s90
    %p104 = scmp.eq.s32.totalorder %s14, 1
    %p105 = por %p103, %p104
    %p107 = scmp.ne.s32.totalorder %s90, %s106
    %p108 = scmp.eq.s32.totalorder %s14, 0
    %p109 = por %p107, %p108
    %p110 = scmp.le.s32.totalorder 1, %s8
    %p111 = scmp.lt.s32.totalorder %s8, 3
    %p112 = pnand %p110, %p111
    %p113 = pneg %p112
    // Predicated region
    $region9: #{tpu_custom_call.1} parent=5 // pred_check
      _
    $region10: #{tpu_custom_call.1} parent=5 // pred_check_branch
      %115 = sbr.rel (%p112) target = $region12
    $region11: #{tpu_custom_call.1} parent=5 // pred_region
      %s116 = ssub.s32 %s8, 1
    $region12: #{tpu_custom_call.1} parent=5 // pred_fallthru
      _
    %p117 = scmp.lt.s32.totalorder %s8, 2
    // Predicated region
    $region13: #{tpu_custom_call.1} parent=5 // pred_check
      %p118 = pneg %p117
    $region14: #{tpu_custom_call.1} parent=5 // pred_check_branch
      %120 = sbr.rel (%p118) target = $region16
    $region15: #{tpu_custom_call.1} parent=5 // pred_region
      // Predicated region
      $region17: #{tpu_custom_call.1} parent=15 // pred_check
        %p121 = pneg %p42
      $region18: #{tpu_custom_call.1} parent=15 // pred_check_branch
        %123 = sbr.rel (%p121) target = $region20
      $region19: #{tpu_custom_call.1} parent=15 // pred_region
        %p124 = scmp.lt.s32.totalorder %s15, 1
        %s125 = scalar_select %p124, %s15, 1
        %p126 = scmp.lt.s32.totalorder %s16, 0
        %s127 = scalar_select %p126, %s16, 0
        %s128 = smul.addr %s125, 4
        %s129 = sadd.s32 %s127, %s128
        %s130 = smul.addr %s129, 8
        %s131 = scalar_lea.vmem %s0, %s130
      $region20: #{tpu_custom_call.1} parent=15 // pred_fallthru
        _
      // Predicated region
      $region21: #{tpu_custom_call.1} parent=15 // pred_check
        %p132 = pneg %p70
      $region22: #{tpu_custom_call.1} parent=15 // pred_check_branch
        %134 = sbr.rel (%p132) target = $region24
      $region23: #{tpu_custom_call.1} parent=15 // pred_region
        %s135 = smul.u32 16, %s16
        %p136 = scmp.lt.s32.totalorder %s15, 1
        %s137 = scalar_select %p136, %s15, 1
        %p138 = scmp.lt.s32.totalorder %s135, 15
        %s139 = scalar_select %p138, %s135, 15
        %s140 = smul.addr %s137, 16
        %s141 = sadd.s32 %s139, %s140
        %s142 = smul.addr %s141, 8
        %s143 = scalar_lea.vmem %s1, %s142
        %s144 = smul.u32 16, %s16
      $region24: #{tpu_custom_call.1} parent=15 // pred_fallthru
        _
    $region16: #{tpu_custom_call.1} parent=5 // pred_fallthru
      _
    %p145 = scmp.le.s32.totalorder 1, %s8
    %p146 = scmp.lt.s32.totalorder %s8, 3
    %p147 = pnand %p145, %p146
    %p148 = pneg %p147
    // Predicated region
    $region25: #{tpu_custom_call.1} parent=5 // pred_check
      _
    $region26: #{tpu_custom_call.1} parent=5 // pred_check_branch
      %150 = sbr.rel (%p147) target = $region28
    $region27: #{tpu_custom_call.1} parent=5 // pred_region
      %s151 = ssub.s32 %s8, 1
      %p152 = scmp.lt.s32.totalorder %s17, 1
      %s153 = scalar_select %p152, %s17, 1
      %p154 = scmp.lt.s32.totalorder %s18, 0
      %s155 = scalar_select %p154, %s18, 0
      %s156 = smul.addr %s153, 4
      %s157 = sadd.s32 %s155, %s156
      %s158 = smul.addr %s157, 8
      %s159 = scalar_lea.vmem %s0, %s158
      %p160 = pneg %p48
      %p161 = pneg %p45
      %s162 = smul.u32 16, %s18
      %p163 = scmp.lt.s32.totalorder %s17, 1
      %s164 = scalar_select %p163, %s17, 1
      %p165 = scmp.lt.s32.totalorder %s162, 15
      %s166 = scalar_select %p165, %s162, 15
      %s167 = smul.addr %s164, 16
      %s168 = sadd.s32 %s166, %s167
      %s169 = smul.addr %s168, 8
      %s170 = scalar_lea.vmem %s1, %s169
      %p171 = pneg %p76
      %p172 = pneg %p73
      %p173 = pneg %p102
      %p174 = pneg %p99
      %p175 = scmp.lt.s32.totalorder %s17, 1
      %s176 = scalar_select %p175, %s17, 1
      %s177 = smul.addr %s176, 16
      %s178 = smul.addr %s177, 4
      %s179 = scalar_lea.vmem %s2, %s178
      %p180 = scmp.lt.s32.totalorder %s17, 1
      %s181 = scalar_select %p180, %s17, 1
      %p182 = scmp.lt.s32.totalorder %s18, 0
      %s183 = scalar_select %p182, %s18, 0
      %s184 = smul.addr %s181, 4
      %s185 = sadd.s32 %s183, %s184
      %s186 = smul.addr %s185, 8
      %s187 = scalar_lea.vmem %s0, %s186
      %s188 = smul.u32 16, %s18
      %p189 = scmp.lt.s32.totalorder %s17, 1
      %s190 = scalar_select %p189, %s17, 1
      %p191 = scmp.lt.s32.totalorder %s188, 15
      %s192 = scalar_select %p191, %s188, 15
      %s193 = smul.addr %s190, 16
      %s194 = sadd.s32 %s192, %s193
      %s195 = smul.addr %s194, 8
      %s196 = scalar_lea.vmem %s1, %s195
      %s197 = smul.u32 16, %s18
      %p198 = scmp.lt.s32.totalorder %s17, 1
      %s199 = scalar_select %p198, %s17, 1
      %s200 = smul.addr %s199, 16
      %s201 = smul.addr %s200, 4
      %s202 = scalar_lea.vmem %s2, %s201
      %p203 = scmp.eq.s32.totalorder %s18, 0
      // Predicated region
      $region29: #{tpu_custom_call.1} parent=27 // pred_check
        %p204 = pneg %p203
      $region30: #{tpu_custom_call.1} parent=27 // pred_check_branch
        %206 = sbr.rel (%p204) target = $region32
      $region31: #{tpu_custom_call.1} parent=27 // pred_region
        %vm207 = vcmask 261120
        %208 = vst.msk [vmem:[#allocation2] sm:$0xff] %vm207, -30000.0
        %209 = vst.msk [vmem:[#allocation2 + $0x8] sm:$0xff] %vm207, -30000.0
        %210 = vst.msk [vmem:[#allocation2 + $0x10] sm:$0xff] %vm207, -30000.0
        %211 = vst.msk [vmem:[#allocation2 + $0x18] sm:$0xff] %vm207, -30000.0
        %212 = vst.msk [vmem:[#allocation2 + $0x20] sm:$0xff] %vm207, -30000.0
        %213 = vst.msk [vmem:[#allocation2 + $0x28] sm:$0xff] %vm207, -30000.0
        %214 = vst.msk [vmem:[#allocation2 + $0x30] sm:$0xff] %vm207, -30000.0
        %215 = vst.msk [vmem:[#allocation2 + $0x38] sm:$0xff] %vm207, -30000.0
        %216 = vst.msk [vmem:[#allocation2 + $0x40] sm:$0xff] %vm207, -30000.0
        %217 = vst.msk [vmem:[#allocation2 + $0x48] sm:$0xff] %vm207, -30000.0
        %218 = vst.msk [vmem:[#allocation2 + $0x50] sm:$0xff] %vm207, -30000.0
        %219 = vst.msk [vmem:[#allocation2 + $0x58] sm:$0xff] %vm207, -30000.0
        %220 = vst.msk [vmem:[#allocation2 + $0x60] sm:$0xff] %vm207, -30000.0
        %221 = vst.msk [vmem:[#allocation2 + $0x68] sm:$0xff] %vm207, -30000.0
        %222 = vst.msk [vmem:[#allocation2 + $0x70] sm:$0xff] %vm207, -30000.0
        %223 = vst.msk [vmem:[#allocation2 + $0x78] sm:$0xff] %vm207, -30000.0
      $region32: #{tpu_custom_call.1} parent=27 // pred_fallthru
        _
      %v224 = vld [vmem:[%s187] sm:$0xff]
      %v225 = vld [vmem:[%s187 + $0x8] sm:$0xff]
      %v226 = vld [vmem:[%s187 + $0x10] sm:$0xff]
      %v227 = vld [vmem:[%s187 + $0x18] sm:$0xff]
      %v228 = vunpack.c.0.s8 %v224
      %v229 = vunpack.c.1.s8 %v224
      %v230 = vunpack.c.2.s8 %v224
      %v231 = vunpack.c.3.s8 %v224
      %v232 = vunpack.c.0.s8 %v225
      %v233 = vunpack.c.1.s8 %v225
      %v234 = vunpack.c.2.s8 %v225
      %v235 = vunpack.c.3.s8 %v225
      %v236 = vunpack.c.0.s8 %v226
      %v237 = vunpack.c.1.s8 %v226
      %v238 = vunpack.c.2.s8 %v226
      %v239 = vunpack.c.3.s8 %v226
      %v240 = vunpack.c.0.s8 %v227
      %v241 = vunpack.c.1.s8 %v227
      %v242 = vunpack.c.2.s8 %v227
      %v243 = vunpack.c.3.s8 %v227
      %v244 = vcvt.s32.f32 %v228
      %v245 = vcvt.s32.f32 %v229
      %v246 = vcvt.s32.f32 %v230
      %v247 = vcvt.s32.f32 %v231
      %v248 = vcvt.s32.f32 %v232
      %v249 = vcvt.s32.f32 %v233
      %v250 = vcvt.s32.f32 %v234
      %v251 = vcvt.s32.f32 %v235
      %v252 = vcvt.s32.f32 %v236
      %v253 = vcvt.s32.f32 %v237
      %v254 = vcvt.s32.f32 %v238
      %v255 = vcvt.s32.f32 %v239
      %v256 = vcvt.s32.f32 %v240
      %v257 = vcvt.s32.f32 %v241
      %v258 = vcvt.s32.f32 %v242
      %v259 = vcvt.s32.f32 %v243
      %260 = vst [vmem:[#allocation3] sm:$0xff] %v244
      %261 = vst [vmem:[#allocation3 + $0x8] sm:$0xff] %v245
      %262 = vst [vmem:[#allocation3 + $0x10] sm:$0xff] %v246
      %263 = vst [vmem:[#allocation3 + $0x18] sm:$0xff] %v247
      %264 = vst [vmem:[#allocation3 + $0x20] sm:$0xff] %v248
      %265 = vst [vmem:[#allocation3 + $0x28] sm:$0xff] %v249
      %266 = vst [vmem:[#allocation3 + $0x30] sm:$0xff] %v250
      %267 = vst [vmem:[#allocation3 + $0x38] sm:$0xff] %v251
      %268 = vst [vmem:[#allocation3 + $0x40] sm:$0xff] %v252
      %269 = vst [vmem:[#allocation3 + $0x48] sm:$0xff] %v253
      %270 = vst [vmem:[#allocation3 + $0x50] sm:$0xff] %v254
      %271 = vst [vmem:[#allocation3 + $0x58] sm:$0xff] %v255
      %272 = vst [vmem:[#allocation3 + $0x60] sm:$0xff] %v256
      %273 = vst [vmem:[#allocation3 + $0x68] sm:$0xff] %v257
      %274 = vst [vmem:[#allocation3 + $0x70] sm:$0xff] %v258
      %275 = vst [vmem:[#allocation3 + $0x78] sm:$0xff] %v259
      loop: start=0, step=1, limit=16
      $region33: #{tpu_custom_call.1} parent=27 // loop_pre_header
        _
      $region34: #{tpu_custom_call.1} parent=27 // loop_header
        %s277 = sphi 0, %s281
        %p278 = scmp.ge.s32.totalorder %s277, 16
      $region35: #{tpu_custom_call.1} parent=27 // loop_header_branch
        %280 = sbr.rel (%p278) target = $region39
      $region36: #{tpu_custom_call.1} parent=27 // loop_body
        %s282 = smul.u32 %s277, 8
        %s283 = scalar_lea.vmem [#allocation2], %s282
        %v284 = vld [vmem:[%s283] sm:$0xff]
        %s285 = scalar_lea.vmem [#allocation3], %s282
        %v286 = vld [vmem:[%s285] sm:$0xff]
        %v287 = vld [vmem:[%s196] sm:$0xff]
        %v288 = vlaneseq
        %v289 = vshrl.u32 %v288, 7
        %v290 = vsub.s32 0, %v289
        %v291 = vrot.slane %v286, %v290
        %293 = vbcast.lane.b32.xlu0 %v291, 256
        %v294 = vpop.permute.xlu0 %293
        %v295 = vlaneseq
        %v296 = vshrl.u32 %v295, 7
        %v297 = vsub.s32 1, %v296
        %v298 = vrot.slane %v286, %v297
        %300 = vbcast.lane.b32.xlu0 %v298, 256
        %v301 = vpop.permute.xlu0 %300
        %v302 = vlaneseq
        %v303 = vshrl.u32 %v302, 7
        %v304 = vsub.s32 2, %v303
        %v305 = vrot.slane %v286, %v304
        %307 = vbcast.lane.b32.xlu0 %v305, 256
        %v308 = vpop.permute.xlu0 %307
        %v309 = vlaneseq
        %v310 = vshrl.u32 %v309, 7
        %v311 = vsub.s32 3, %v310
        %v312 = vrot.slane %v286, %v311
        %314 = vbcast.lane.b32.xlu0 %v312, 256
        %v315 = vpop.permute.xlu0 %314
        %v316 = vlaneseq
        %v317 = vshrl.u32 %v316, 7
        %v318 = vsub.s32 4, %v317
        %v319 = vrot.slane %v286, %v318
        %321 = vbcast.lane.b32.xlu0 %v319, 256
        %v322 = vpop.permute.xlu0 %321
        %v323 = vlaneseq
        %v324 = vshrl.u32 %v323, 7
        %v325 = vsub.s32 5, %v324
        %v326 = vrot.slane %v286, %v325
        %328 = vbcast.lane.b32.xlu0 %v326, 256
        %v329 = vpop.permute.xlu0 %328
        %v330 = vlaneseq
        %v331 = vshrl.u32 %v330, 7
        %v332 = vsub.s32 6, %v331
        %v333 = vrot.slane %v286, %v332
        %335 = vbcast.lane.b32.xlu0 %v333, 256
        %v336 = vpop.permute.xlu0 %335
        %v337 = vlaneseq
        %v338 = vshrl.u32 %v337, 7
        %v339 = vsub.s32 7, %v338
        %v340 = vrot.slane %v286, %v339
        %342 = vbcast.lane.b32.xlu0 %v340, 256
        %v343 = vpop.permute.xlu0 %342
        %vm344 = vcmp.gt.f32.partialorder %v294, 0.0
        %vm345 = vcmp.gt.f32.partialorder %v301, 0.0
        %vm346 = vcmp.gt.f32.partialorder %v308, 0.0
        %vm347 = vcmp.gt.f32.partialorder %v315, 0.0
        %vm348 = vcmp.gt.f32.partialorder %v322, 0.0
        %vm349 = vcmp.gt.f32.partialorder %v329, 0.0
        %vm350 = vcmp.gt.f32.partialorder %v336, 0.0
        %vm351 = vcmp.gt.f32.partialorder %v343, 0.0
        %v352 = vsel %vm344, 1, 0
        %v353 = vsel %vm345, 1, 0
        %v354 = vsel %vm346, 1, 0
        %v355 = vsel %vm347, 1, 0
        %v356 = vsel %vm348, 1, 0
        %v357 = vsel %vm349, 1, 0
        %v358 = vsel %vm350, 1, 0
        %v359 = vsel %vm351, 1, 0
        %vm360 = vcmp.eq.s32.totalorder %v352, 1
        %vm361 = vcmp.eq.s32.totalorder %v353, 1
        %vm362 = vcmp.eq.s32.totalorder %v354, 1
        %vm363 = vcmp.eq.s32.totalorder %v355, 1
        %vm364 = vcmp.eq.s32.totalorder %v356, 1
        %vm365 = vcmp.eq.s32.totalorder %v357, 1
        %vm366 = vcmp.eq.s32.totalorder %v358, 1
        %vm367 = vcmp.eq.s32.totalorder %v359, 1
        %v368 = vsel %vm360, %v287, -30000.0
        %v369 = vsel %vm361, %v287, -30000.0
        %v370 = vsel %vm362, %v287, -30000.0
        %v371 = vsel %vm363, %v287, -30000.0
        %v372 = vsel %vm364, %v287, -30000.0
        %v373 = vsel %vm365, %v287, -30000.0
        %v374 = vsel %vm366, %v287, -30000.0
        %v375 = vsel %vm367, %v287, -30000.0
        %vm376 = vcmask 261120
        %v377 = vsel %vm376, %v368, -inf
        %v378 = vrot.slane %v377, 4
        %v379 = vmax.f32 %v377, %v378
        %v380 = vrot.slane %v379, 2
        %v381 = vmax.f32 %v379, %v380
        %v382 = vrot.slane %v381, 1
        %v383 = vmax.f32 %v381, %v382
        %v384 = vsel %vm376, %v369, -inf
        %v385 = vrot.slane %v384, 4
        %v386 = vmax.f32 %v384, %v385
        %v387 = vrot.slane %v386, 2
        %v388 = vmax.f32 %v386, %v387
        %v389 = vrot.slane %v388, 1
        %v390 = vmax.f32 %v388, %v389
        %v391 = vsel %vm376, %v370, -inf
        %v392 = vrot.slane %v391, 4
        %v393 = vmax.f32 %v391, %v392
        %v394 = vrot.slane %v393, 2
        %v395 = vmax.f32 %v393, %v394
        %v396 = vrot.slane %v395, 1
        %v397 = vmax.f32 %v395, %v396
        %v398 = vsel %vm376, %v371, -inf
        %v399 = vrot.slane %v398, 4
        %v400 = vmax.f32 %v398, %v399
        %v401 = vrot.slane %v400, 2
        %v402 = vmax.f32 %v400, %v401
        %v403 = vrot.slane %v402, 1
        %v404 = vmax.f32 %v402, %v403
        %v405 = vsel %vm376, %v372, -inf
        %v406 = vrot.slane %v405, 4
        %v407 = vmax.f32 %v405, %v406
        %v408 = vrot.slane %v407, 2
        %v409 = vmax.f32 %v407, %v408
        %v410 = vrot.slane %v409, 1
        %v411 = vmax.f32 %v409, %v410
        %v412 = vsel %vm376, %v373, -inf
        %v413 = vrot.slane %v412, 4
        %v414 = vmax.f32 %v412, %v413
        %v415 = vrot.slane %v414, 2
        %v416 = vmax.f32 %v414, %v415
        %v417 = vrot.slane %v416, 1
        %v418 = vmax.f32 %v416, %v417
        %v419 = vsel %vm376, %v374, -inf
        %v420 = vrot.slane %v419, 4
        %v421 = vmax.f32 %v419, %v420
        %v422 = vrot.slane %v421, 2
        %v423 = vmax.f32 %v421, %v422
        %v424 = vrot.slane %v423, 1
        %v425 = vmax.f32 %v423, %v424
        %v426 = vsel %vm376, %v375, -inf
        %v427 = vrot.slane %v426, 4
        %v428 = vmax.f32 %v426, %v427
        %v429 = vrot.slane %v428, 2
        %v430 = vmax.f32 %v428, %v429
        %v431 = vrot.slane %v430, 1
        %v432 = vmax.f32 %v430, %v431
        %vm441 = vcmask 1041409
        %v442 = vsel %vm441, %v390, %v383
        %vm443 = vcmask 1042434
        %v444 = vsel %vm443, %v397, %v442
        %vm445 = vcmask 1043459
        %v446 = vsel %vm445, %v404, %v444
        %vm447 = vcmask 1044484
        %v448 = vsel %vm447, %v411, %v446
        %vm449 = vcmask 1045509
        %v450 = vsel %vm449, %v418, %v448
        %vm451 = vcmask 1046534
        %v452 = vsel %vm451, %v425, %v450
        %vm453 = vcmask 1047559
        %v454 = vsel %vm453, %v432, %v452
        %v456 = vmax.f32 %v284, %v454
        %v457 = vld [vmem:[%s196 + $0x8] sm:$0xff]
        %s459 = sor.u32 256, 8
        %460 = vbcast.lane.b32.xlu0 %v291, %s459
        %v461 = vpop.permute.xlu0 %460
        %s463 = sor.u32 256, 8
        %464 = vbcast.lane.b32.xlu0 %v298, %s463
        %v465 = vpop.permute.xlu0 %464
        %s467 = sor.u32 256, 8
        %468 = vbcast.lane.b32.xlu0 %v305, %s467
        %v469 = vpop.permute.xlu0 %468
        %s471 = sor.u32 256, 8
        %472 = vbcast.lane.b32.xlu0 %v312, %s471
        %v473 = vpop.permute.xlu0 %472
        %s475 = sor.u32 256, 8
        %476 = vbcast.lane.b32.xlu0 %v319, %s475
        %v477 = vpop.permute.xlu0 %476
        %s479 = sor.u32 256, 8
        %480 = vbcast.lane.b32.xlu0 %v326, %s479
        %v481 = vpop.permute.xlu0 %480
        %s483 = sor.u32 256, 8
        %484 = vbcast.lane.b32.xlu0 %v333, %s483
        %v485 = vpop.permute.xlu0 %484
        %s487 = sor.u32 256, 8
        %488 = vbcast.lane.b32.xlu0 %v340, %s487
        %v489 = vpop.permute.xlu0 %488
        %vm490 = vcmp.gt.f32.partialorder %v461, 0.0
        %vm491 = vcmp.gt.f32.partialorder %v465, 0.0
        %vm492 = vcmp.gt.f32.partialorder %v469, 0.0
        %vm493 = vcmp.gt.f32.partialorder %v473, 0.0
        %vm494 = vcmp.gt.f32.partialorder %v477, 0.0
        %vm495 = vcmp.gt.f32.partialorder %v481, 0.0
        %vm496 = vcmp.gt.f32.partialorder %v485, 0.0
        %vm497 = vcmp.gt.f32.partialorder %v489, 0.0
        %v498 = vsel %vm490, 1, 0
        %v499 = vsel %vm491, 1, 0
        %v500 = vsel %vm492, 1, 0
        %v501 = vsel %vm493, 1, 0
        %v502 = vsel %vm494, 1, 0
        %v503 = vsel %vm495, 1, 0
        %v504 = vsel %vm496, 1, 0
        %v505 = vsel %vm497, 1, 0
        %vm506 = vcmp.eq.s32.totalorder %v498, 1
        %vm507 = vcmp.eq.s32.totalorder %v499, 1
        %vm508 = vcmp.eq.s32.totalorder %v500, 1
        %vm509 = vcmp.eq.s32.totalorder %v501, 1
        %vm510 = vcmp.eq.s32.totalorder %v502, 1
        %vm511 = vcmp.eq.s32.totalorder %v503, 1
        %vm512 = vcmp.eq.s32.totalorder %v504, 1
        %vm513 = vcmp.eq.s32.totalorder %v505, 1
        %v514 = vsel %vm506, %v457, -30000.0
        %v515 = vsel %vm507, %v457, -30000.0
        %v516 = vsel %vm508, %v457, -30000.0
        %v517 = vsel %vm509, %v457, -30000.0
        %v518 = vsel %vm510, %v457, -30000.0
        %v519 = vsel %vm511, %v457, -30000.0
        %v520 = vsel %vm512, %v457, -30000.0
        %v521 = vsel %vm513, %v457, -30000.0
        %v522 = vsel %vm376, %v514, -inf
        %v523 = vrot.slane %v522, 4
        %v524 = vmax.f32 %v522, %v523
        %v525 = vrot.slane %v524, 2
        %v526 = vmax.f32 %v524, %v525
        %v527 = vrot.slane %v526, 1
        %v528 = vmax.f32 %v526, %v527
        %v529 = vsel %vm376, %v515, -inf
        %v530 = vrot.slane %v529, 4
        %v531 = vmax.f32 %v529, %v530
        %v532 = vrot.slane %v531, 2
        %v533 = vmax.f32 %v531, %v532
        %v534 = vrot.slane %v533, 1
        %v535 = vmax.f32 %v533, %v534
        %v536 = vsel %vm376, %v516, -inf
        %v537 = vrot.slane %v536, 4
        %v538 = vmax.f32 %v536, %v537
        %v539 = vrot.slane %v538, 2
        %v540 = vmax.f32 %v538, %v539
        %v541 = vrot.slane %v540, 1
        %v542 = vmax.f32 %v540, %v541
        %v543 = vsel %vm376, %v517, -inf
        %v544 = vrot.slane %v543, 4
        %v545 = vmax.f32 %v543, %v544
        %v546 = vrot.slane %v545, 2
        %v547 = vmax.f32 %v545, %v546
        %v548 = vrot.slane %v547, 1
        %v549 = vmax.f32 %v547, %v548
        %v550 = vsel %vm376, %v518, -inf
        %v551 = vrot.slane %v550, 4
        %v552 = vmax.f32 %v550, %v551
        %v553 = vrot.slane %v552, 2
        %v554 = vmax.f32 %v552, %v553
        %v555 = vrot.slane %v554, 1
        %v556 = vmax.f32 %v554, %v555
        %v557 = vsel %vm376, %v519, -inf
        %v558 = vrot.slane %v557, 4
        %v559 = vmax.f32 %v557, %v558
        %v560 = vrot.slane %v559, 2
        %v561 = vmax.f32 %v559, %v560
        %v562 = vrot.slane %v561, 1
        %v563 = vmax.f32 %v561, %v562
        %v564 = vsel %vm376, %v520, -inf
        %v565 = vrot.slane %v564, 4
        %v566 = vmax.f32 %v564, %v565
        %v567 = vrot.slane %v566, 2
        %v568 = vmax.f32 %v566, %v567
        %v569 = vrot.slane %v568, 1
        %v570 = vmax.f32 %v568, %v569
        %v571 = vsel %vm376, %v521, -inf
        %v572 = vrot.slane %v571, 4
        %v573 = vmax.f32 %v571, %v572
        %v574 = vrot.slane %v573, 2
        %v575 = vmax.f32 %v573, %v574
        %v576 = vrot.slane %v575, 1
        %v577 = vmax.f32 %v575, %v576
        %v586 = vsel %vm441, %v535, %v528
        %v587 = vsel %vm443, %v542, %v586
        %v588 = vsel %vm445, %v549, %v587
        %v589 = vsel %vm447, %v556, %v588
        %v590 = vsel %vm449, %v563, %v589
        %v591 = vsel %vm451, %v570, %v590
        %v592 = vsel %vm453, %v577, %v591
        %v594 = vmax.f32 %v456, %v592
        %v595 = vld [vmem:[%s196 + $0x10] sm:$0xff]
        %s597 = sor.u32 256, 16
        %598 = vbcast.lane.b32.xlu0 %v291, %s597
        %v599 = vpop.permute.xlu0 %598
        %s601 = sor.u32 256, 16
        %602 = vbcast.lane.b32.xlu0 %v298, %s601
        %v603 = vpop.permute.xlu0 %602
        %s605 = sor.u32 256, 16
        %606 = vbcast.lane.b32.xlu0 %v305, %s605
        %v607 = vpop.permute.xlu0 %606
        %s609 = sor.u32 256, 16
        %610 = vbcast.lane.b32.xlu0 %v312, %s609
        %v611 = vpop.permute.xlu0 %610
        %s613 = sor.u32 256, 16
        %614 = vbcast.lane.b32.xlu0 %v319, %s613
        %v615 = vpop.permute.xlu0 %614
        %s617 = sor.u32 256, 16
        %618 = vbcast.lane.b32.xlu0 %v326, %s617
        %v619 = vpop.permute.xlu0 %618
        %s621 = sor.u32 256, 16
        %622 = vbcast.lane.b32.xlu0 %v333, %s621
        %v623 = vpop.permute.xlu0 %622
        %s625 = sor.u32 256, 16
        %626 = vbcast.lane.b32.xlu0 %v340, %s625
        %v627 = vpop.permute.xlu0 %626
        %vm628 = vcmp.gt.f32.partialorder %v599, 0.0
        %vm629 = vcmp.gt.f32.partialorder %v603, 0.0
        %vm630 = vcmp.gt.f32.partialorder %v607, 0.0
        %vm631 = vcmp.gt.f32.partialorder %v611, 0.0
        %vm632 = vcmp.gt.f32.partialorder %v615, 0.0
        %vm633 = vcmp.gt.f32.partialorder %v619, 0.0
        %vm634 = vcmp.gt.f32.partialorder %v623, 0.0
        %vm635 = vcmp.gt.f32.partialorder %v627, 0.0
        %v636 = vsel %vm628, 1, 0
        %v637 = vsel %vm629, 1, 0
        %v638 = vsel %vm630, 1, 0
        %v639 = vsel %vm631, 1, 0
        %v640 = vsel %vm632, 1, 0
        %v641 = vsel %vm633, 1, 0
        %v642 = vsel %vm634, 1, 0
        %v643 = vsel %vm635, 1, 0
        %vm644 = vcmp.eq.s32.totalorder %v636, 1
        %vm645 = vcmp.eq.s32.totalorder %v637, 1
        %vm646 = vcmp.eq.s32.totalorder %v638, 1
        %vm647 = vcmp.eq.s32.totalorder %v639, 1
        %vm648 = vcmp.eq.s32.totalorder %v640, 1
        %vm649 = vcmp.eq.s32.totalorder %v641, 1
        %vm650 = vcmp.eq.s32.totalorder %v642, 1
        %vm651 = vcmp.eq.s32.totalorder %v643, 1
        %v652 = vsel %vm644, %v595, -30000.0
        %v653 = vsel %vm645, %v595, -30000.0
        %v654 = vsel %vm646, %v595, -30000.0
        %v655 = vsel %vm647, %v595, -30000.0
        %v656 = vsel %vm648, %v595, -30000.0
        %v657 = vsel %vm649, %v595, -30000.0
        %v658 = vsel %vm650, %v595, -30000.0
        %v659 = vsel %vm651, %v595, -30000.0
        %v660 = vsel %vm376, %v652, -inf
        %v661 = vrot.slane %v660, 4
        %v662 = vmax.f32 %v660, %v661
        %v663 = vrot.slane %v662, 2
        %v664 = vmax.f32 %v662, %v663
        %v665 = vrot.slane %v664, 1
        %v666 = vmax.f32 %v664, %v665
        %v667 = vsel %vm376, %v653, -inf
        %v668 = vrot.slane %v667, 4
        %v669 = vmax.f32 %v667, %v668
        %v670 = vrot.slane %v669, 2
        %v671 = vmax.f32 %v669, %v670
        %v672 = vrot.slane %v671, 1
        %v673 = vmax.f32 %v671, %v672
        %v674 = vsel %vm376, %v654, -inf
        %v675 = vrot.slane %v674, 4
        %v676 = vmax.f32 %v674, %v675
        %v677 = vrot.slane %v676, 2
        %v678 = vmax.f32 %v676, %v677
        %v679 = vrot.slane %v678, 1
        %v680 = vmax.f32 %v678, %v679
        %v681 = vsel %vm376, %v655, -inf
        %v682 = vrot.slane %v681, 4
        %v683 = vmax.f32 %v681, %v682
        %v684 = vrot.slane %v683, 2
        %v685 = vmax.f32 %v683, %v684
        %v686 = vrot.slane %v685, 1
        %v687 = vmax.f32 %v685, %v686
        %v688 = vsel %vm376, %v656, -inf
        %v689 = vrot.slane %v688, 4
        %v690 = vmax.f32 %v688, %v689
        %v691 = vrot.slane %v690, 2
        %v692 = vmax.f32 %v690, %v691
        %v693 = vrot.slane %v692, 1
        %v694 = vmax.f32 %v692, %v693
        %v695 = vsel %vm376, %v657, -inf
        %v696 = vrot.slane %v695, 4
        %v697 = vmax.f32 %v695, %v696
        %v698 = vrot.slane %v697, 2
        %v699 = vmax.f32 %v697, %v698
        %v700 = vrot.slane %v699, 1
        %v701 = vmax.f32 %v699, %v700
        %v702 = vsel %vm376, %v658, -inf
        %v703 = vrot.slane %v702, 4
        %v704 = vmax.f32 %v702, %v703
        %v705 = vrot.slane %v704, 2
        %v706 = vmax.f32 %v704, %v705
        %v707 = vrot.slane %v706, 1
        %v708 = vmax.f32 %v706, %v707
        %v709 = vsel %vm376, %v659, -inf
        %v710 = vrot.slane %v709, 4
        %v711 = vmax.f32 %v709, %v710
        %v712 = vrot.slane %v711, 2
        %v713 = vmax.f32 %v711, %v712
        %v714 = vrot.slane %v713, 1
        %v715 = vmax.f32 %v713, %v714
        %v724 = vsel %vm441, %v673, %v666
        %v725 = vsel %vm443, %v680, %v724
        %v726 = vsel %vm445, %v687, %v725
        %v727 = vsel %vm447, %v694, %v726
        %v728 = vsel %vm449, %v701, %v727
        %v729 = vsel %vm451, %v708, %v728
        %v730 = vsel %vm453, %v715, %v729
        %v732 = vmax.f32 %v594, %v730
        %v733 = vld [vmem:[%s196 + $0x18] sm:$0xff]
        %s735 = sor.u32 256, 24
        %736 = vbcast.lane.b32.xlu0 %v291, %s735
        %v737 = vpop.permute.xlu0 %736
        %s739 = sor.u32 256, 24
        %740 = vbcast.lane.b32.xlu0 %v298, %s739
        %v741 = vpop.permute.xlu0 %740
        %s743 = sor.u32 256, 24
        %744 = vbcast.lane.b32.xlu0 %v305, %s743
        %v745 = vpop.permute.xlu0 %744
        %s747 = sor.u32 256, 24
        %748 = vbcast.lane.b32.xlu0 %v312, %s747
        %v749 = vpop.permute.xlu0 %748
        %s751 = sor.u32 256, 24
        %752 = vbcast.lane.b32.xlu0 %v319, %s751
        %v753 = vpop.permute.xlu0 %752
        %s755 = sor.u32 256, 24
        %756 = vbcast.lane.b32.xlu0 %v326, %s755
        %v757 = vpop.permute.xlu0 %756
        %s759 = sor.u32 256, 24
        %760 = vbcast.lane.b32.xlu0 %v333, %s759
        %v761 = vpop.permute.xlu0 %760
        %s763 = sor.u32 256, 24
        %764 = vbcast.lane.b32.xlu0 %v340, %s763
        %v765 = vpop.permute.xlu0 %764
        %vm766 = vcmp.gt.f32.partialorder %v737, 0.0
        %vm767 = vcmp.gt.f32.partialorder %v741, 0.0
        %vm768 = vcmp.gt.f32.partialorder %v745, 0.0
        %vm769 = vcmp.gt.f32.partialorder %v749, 0.0
        %vm770 = vcmp.gt.f32.partialorder %v753, 0.0
        %vm771 = vcmp.gt.f32.partialorder %v757, 0.0
        %vm772 = vcmp.gt.f32.partialorder %v761, 0.0
        %vm773 = vcmp.gt.f32.partialorder %v765, 0.0
        %v774 = vsel %vm766, 1, 0
        %v775 = vsel %vm767, 1, 0
        %v776 = vsel %vm768, 1, 0
        %v777 = vsel %vm769, 1, 0
        %v778 = vsel %vm770, 1, 0
        %v779 = vsel %vm771, 1, 0
        %v780 = vsel %vm772, 1, 0
        %v781 = vsel %vm773, 1, 0
        %vm782 = vcmp.eq.s32.totalorder %v774, 1
        %vm783 = vcmp.eq.s32.totalorder %v775, 1
        %vm784 = vcmp.eq.s32.totalorder %v776, 1
        %vm785 = vcmp.eq.s32.totalorder %v777, 1
        %vm786 = vcmp.eq.s32.totalorder %v778, 1
        %vm787 = vcmp.eq.s32.totalorder %v779, 1
        %vm788 = vcmp.eq.s32.totalorder %v780, 1
        %vm789 = vcmp.eq.s32.totalorder %v781, 1
        %v790 = vsel %vm782, %v733, -30000.0
        %v791 = vsel %vm783, %v733, -30000.0
        %v792 = vsel %vm784, %v733, -30000.0
        %v793 = vsel %vm785, %v733, -30000.0
        %v794 = vsel %vm786, %v733, -30000.0
        %v795 = vsel %vm787, %v733, -30000.0
        %v796 = vsel %vm788, %v733, -30000.0
        %v797 = vsel %vm789, %v733, -30000.0
        %v798 = vsel %vm376, %v790, -inf
        %v799 = vrot.slane %v798, 4
        %v800 = vmax.f32 %v798, %v799
        %v801 = vrot.slane %v800, 2
        %v802 = vmax.f32 %v800, %v801
        %v803 = vrot.slane %v802, 1
        %v804 = vmax.f32 %v802, %v803
        %v805 = vsel %vm376, %v791, -inf
        %v806 = vrot.slane %v805, 4
        %v807 = vmax.f32 %v805, %v806
        %v808 = vrot.slane %v807, 2
        %v809 = vmax.f32 %v807, %v808
        %v810 = vrot.slane %v809, 1
        %v811 = vmax.f32 %v809, %v810
        %v812 = vsel %vm376, %v792, -inf
        %v813 = vrot.slane %v812, 4
        %v814 = vmax.f32 %v812, %v813
        %v815 = vrot.slane %v814, 2
        %v816 = vmax.f32 %v814, %v815
        %v817 = vrot.slane %v816, 1
        %v818 = vmax.f32 %v816, %v817
        %v819 = vsel %vm376, %v793, -inf
        %v820 = vrot.slane %v819, 4
        %v821 = vmax.f32 %v819, %v820
        %v822 = vrot.slane %v821, 2
        %v823 = vmax.f32 %v821, %v822
        %v824 = vrot.slane %v823, 1
        %v825 = vmax.f32 %v823, %v824
        %v826 = vsel %vm376, %v794, -inf
        %v827 = vrot.slane %v826, 4
        %v828 = vmax.f32 %v826, %v827
        %v829 = vrot.slane %v828, 2
        %v830 = vmax.f32 %v828, %v829
        %v831 = vrot.slane %v830, 1
        %v832 = vmax.f32 %v830, %v831
        %v833 = vsel %vm376, %v795, -inf
        %v834 = vrot.slane %v833, 4
        %v835 = vmax.f32 %v833, %v834
        %v836 = vrot.slane %v835, 2
        %v837 = vmax.f32 %v835, %v836
        %v838 = vrot.slane %v837, 1
        %v839 = vmax.f32 %v837, %v838
        %v840 = vsel %vm376, %v796, -inf
        %v841 = vrot.slane %v840, 4
        %v842 = vmax.f32 %v840, %v841
        %v843 = vrot.slane %v842, 2
        %v844 = vmax.f32 %v842, %v843
        %v845 = vrot.slane %v844, 1
        %v846 = vmax.f32 %v844, %v845
        %v847 = vsel %vm376, %v797, -inf
        %v848 = vrot.slane %v847, 4
        %v849 = vmax.f32 %v847, %v848
        %v850 = vrot.slane %v849, 2
        %v851 = vmax.f32 %v849, %v850
        %v852 = vrot.slane %v851, 1
        %v853 = vmax.f32 %v851, %v852
        %v862 = vsel %vm441, %v811, %v804
        %v863 = vsel %vm443, %v818, %v862
        %v864 = vsel %vm445, %v825, %v863
        %v865 = vsel %vm447, %v832, %v864
        %v866 = vsel %vm449, %v839, %v865
        %v867 = vsel %vm451, %v846, %v866
        %v868 = vsel %vm453, %v853, %v867
        %v870 = vmax.f32 %v732, %v868
        %v871 = vld [vmem:[%s196 + $0x20] sm:$0xff]
        %s873 = sor.u32 256, 32
        %874 = vbcast.lane.b32.xlu0 %v291, %s873
        %v875 = vpop.permute.xlu0 %874
        %s877 = sor.u32 256, 32
        %878 = vbcast.lane.b32.xlu0 %v298, %s877
        %v879 = vpop.permute.xlu0 %878
        %s881 = sor.u32 256, 32
        %882 = vbcast.lane.b32.xlu0 %v305, %s881
        %v883 = vpop.permute.xlu0 %882
        %s885 = sor.u32 256, 32
        %886 = vbcast.lane.b32.xlu0 %v312, %s885
        %v887 = vpop.permute.xlu0 %886
        %s889 = sor.u32 256, 32
        %890 = vbcast.lane.b32.xlu0 %v319, %s889
        %v891 = vpop.permute.xlu0 %890
        %s893 = sor.u32 256, 32
        %894 = vbcast.lane.b32.xlu0 %v326, %s893
        %v895 = vpop.permute.xlu0 %894
        %s897 = sor.u32 256, 32
        %898 = vbcast.lane.b32.xlu0 %v333, %s897
        %v899 = vpop.permute.xlu0 %898
        %s901 = sor.u32 256, 32
        %902 = vbcast.lane.b32.xlu0 %v340, %s901
        %v903 = vpop.permute.xlu0 %902
        %vm904 = vcmp.gt.f32.partialorder %v875, 0.0
        %vm905 = vcmp.gt.f32.partialorder %v879, 0.0
        %vm906 = vcmp.gt.f32.partialorder %v883, 0.0
        %vm907 = vcmp.gt.f32.partialorder %v887, 0.0
        %vm908 = vcmp.gt.f32.partialorder %v891, 0.0
        %vm909 = vcmp.gt.f32.partialorder %v895, 0.0
        %vm910 = vcmp.gt.f32.partialorder %v899, 0.0
        %vm911 = vcmp.gt.f32.partialorder %v903, 0.0
        %v912 = vsel %vm904, 1, 0
        %v913 = vsel %vm905, 1, 0
        %v914 = vsel %vm906, 1, 0
        %v915 = vsel %vm907, 1, 0
        %v916 = vsel %vm908, 1, 0
        %v917 = vsel %vm909, 1, 0
        %v918 = vsel %vm910, 1, 0
        %v919 = vsel %vm911, 1, 0
        %vm920 = vcmp.eq.s32.totalorder %v912, 1
        %vm921 = vcmp.eq.s32.totalorder %v913, 1
        %vm922 = vcmp.eq.s32.totalorder %v914, 1
        %vm923 = vcmp.eq.s32.totalorder %v915, 1
        %vm924 = vcmp.eq.s32.totalorder %v916, 1
        %vm925 = vcmp.eq.s32.totalorder %v917, 1
        %vm926 = vcmp.eq.s32.totalorder %v918, 1
        %vm927 = vcmp.eq.s32.totalorder %v919, 1
        %v928 = vsel %vm920, %v871, -30000.0
        %v929 = vsel %vm921, %v871, -30000.0
        %v930 = vsel %vm922, %v871, -30000.0
        %v931 = vsel %vm923, %v871, -30000.0
        %v932 = vsel %vm924, %v871, -30000.0
        %v933 = vsel %vm925, %v871, -30000.0
        %v934 = vsel %vm926, %v871, -30000.0
        %v935 = vsel %vm927, %v871, -30000.0
        %v936 = vsel %vm376, %v928, -inf
        %v937 = vrot.slane %v936, 4
        %v938 = vmax.f32 %v936, %v937
        %v939 = vrot.slane %v938, 2
        %v940 = vmax.f32 %v938, %v939
        %v941 = vrot.slane %v940, 1
        %v942 = vmax.f32 %v940, %v941
        %v943 = vsel %vm376, %v929, -inf
        %v944 = vrot.slane %v943, 4
        %v945 = vmax.f32 %v943, %v944
        %v946 = vrot.slane %v945, 2
        %v947 = vmax.f32 %v945, %v946
        %v948 = vrot.slane %v947, 1
        %v949 = vmax.f32 %v947, %v948
        %v950 = vsel %vm376, %v930, -inf
        %v951 = vrot.slane %v950, 4
        %v952 = vmax.f32 %v950, %v951
        %v953 = vrot.slane %v952, 2
        %v954 = vmax.f32 %v952, %v953
        %v955 = vrot.slane %v954, 1
        %v956 = vmax.f32 %v954, %v955
        %v957 = vsel %vm376, %v931, -inf
        %v958 = vrot.slane %v957, 4
        %v959 = vmax.f32 %v957, %v958
        %v960 = vrot.slane %v959, 2
        %v961 = vmax.f32 %v959, %v960
        %v962 = vrot.slane %v961, 1
        %v963 = vmax.f32 %v961, %v962
        %v964 = vsel %vm376, %v932, -inf
        %v965 = vrot.slane %v964, 4
        %v966 = vmax.f32 %v964, %v965
        %v967 = vrot.slane %v966, 2
        %v968 = vmax.f32 %v966, %v967
        %v969 = vrot.slane %v968, 1
        %v970 = vmax.f32 %v968, %v969
        %v971 = vsel %vm376, %v933, -inf
        %v972 = vrot.slane %v971, 4
        %v973 = vmax.f32 %v971, %v972
        %v974 = vrot.slane %v973, 2
        %v975 = vmax.f32 %v973, %v974
        %v976 = vrot.slane %v975, 1
        %v977 = vmax.f32 %v975, %v976
        %v978 = vsel %vm376, %v934, -inf
        %v979 = vrot.slane %v978, 4
        %v980 = vmax.f32 %v978, %v979
        %v981 = vrot.slane %v980, 2
        %v982 = vmax.f32 %v980, %v981
        %v983 = vrot.slane %v982, 1
        %v984 = vmax.f32 %v982, %v983
        %v985 = vsel %vm376, %v935, -inf
        %v986 = vrot.slane %v985, 4
        %v987 = vmax.f32 %v985, %v986
        %v988 = vrot.slane %v987, 2
        %v989 = vmax.f32 %v987, %v988
        %v990 = vrot.slane %v989, 1
        %v991 = vmax.f32 %v989, %v990
        %v1000 = vsel %vm441, %v949, %v942
        %v1001 = vsel %vm443, %v956, %v1000
        %v1002 = vsel %vm445, %v963, %v1001
        %v1003 = vsel %vm447, %v970, %v1002
        %v1004 = vsel %vm449, %v977, %v1003
        %v1005 = vsel %vm451, %v984, %v1004
        %v1006 = vsel %vm453, %v991, %v1005
        %v1008 = vmax.f32 %v870, %v1006
        %v1009 = vld [vmem:[%s196 + $0x28] sm:$0xff]
        %s1011 = sor.u32 256, 40
        %1012 = vbcast.lane.b32.xlu0 %v291, %s1011
        %v1013 = vpop.permute.xlu0 %1012
        %s1015 = sor.u32 256, 40
        %1016 = vbcast.lane.b32.xlu0 %v298, %s1015
        %v1017 = vpop.permute.xlu0 %1016
        %s1019 = sor.u32 256, 40
        %1020 = vbcast.lane.b32.xlu0 %v305, %s1019
        %v1021 = vpop.permute.xlu0 %1020
        %s1023 = sor.u32 256, 40
        %1024 = vbcast.lane.b32.xlu0 %v312, %s1023
        %v1025 = vpop.permute.xlu0 %1024
        %s1027 = sor.u32 256, 40
        %1028 = vbcast.lane.b32.xlu0 %v319, %s1027
        %v1029 = vpop.permute.xlu0 %1028
        %s1031 = sor.u32 256, 40
        %1032 = vbcast.lane.b32.xlu0 %v326, %s1031
        %v1033 = vpop.permute.xlu0 %1032
        %s1035 = sor.u32 256, 40
        %1036 = vbcast.lane.b32.xlu0 %v333, %s1035
        %v1037 = vpop.permute.xlu0 %1036
        %s1039 = sor.u32 256, 40
        %1040 = vbcast.lane.b32.xlu0 %v340, %s1039
        %v1041 = vpop.permute.xlu0 %1040
        %vm1042 = vcmp.gt.f32.partialorder %v1013, 0.0
        %vm1043 = vcmp.gt.f32.partialorder %v1017, 0.0
        %vm1044 = vcmp.gt.f32.partialorder %v1021, 0.0
        %vm1045 = vcmp.gt.f32.partialorder %v1025, 0.0
        %vm1046 = vcmp.gt.f32.partialorder %v1029, 0.0
        %vm1047 = vcmp.gt.f32.partialorder %v1033, 0.0
        %vm1048 = vcmp.gt.f32.partialorder %v1037, 0.0
        %vm1049 = vcmp.gt.f32.partialorder %v1041, 0.0
        %v1050 = vsel %vm1042, 1, 0
        %v1051 = vsel %vm1043, 1, 0
        %v1052 = vsel %vm1044, 1, 0
        %v1053 = vsel %vm1045, 1, 0
        %v1054 = vsel %vm1046, 1, 0
        %v1055 = vsel %vm1047, 1, 0
        %v1056 = vsel %vm1048, 1, 0
        %v1057 = vsel %vm1049, 1, 0
        %vm1058 = vcmp.eq.s32.totalorder %v1050, 1
        %vm1059 = vcmp.eq.s32.totalorder %v1051, 1
        %vm1060 = vcmp.eq.s32.totalorder %v1052, 1
        %vm1061 = vcmp.eq.s32.totalorder %v1053, 1
        %vm1062 = vcmp.eq.s32.totalorder %v1054, 1
        %vm1063 = vcmp.eq.s32.totalorder %v1055, 1
        %vm1064 = vcmp.eq.s32.totalorder %v1056, 1
        %vm1065 = vcmp.eq.s32.totalorder %v1057, 1
        %v1066 = vsel %vm1058, %v1009, -30000.0
        %v1067 = vsel %vm1059, %v1009, -30000.0
        %v1068 = vsel %vm1060, %v1009, -30000.0
        %v1069 = vsel %vm1061, %v1009, -30000.0
        %v1070 = vsel %vm1062, %v1009, -30000.0
        %v1071 = vsel %vm1063, %v1009, -30000.0
        %v1072 = vsel %vm1064, %v1009, -30000.0
        %v1073 = vsel %vm1065, %v1009, -30000.0
        %v1074 = vsel %vm376, %v1066, -inf
        %v1075 = vrot.slane %v1074, 4
        %v1076 = vmax.f32 %v1074, %v1075
        %v1077 = vrot.slane %v1076, 2
        %v1078 = vmax.f32 %v1076, %v1077
        %v1079 = vrot.slane %v1078, 1
        %v1080 = vmax.f32 %v1078, %v1079
        %v1081 = vsel %vm376, %v1067, -inf
        %v1082 = vrot.slane %v1081, 4
        %v1083 = vmax.f32 %v1081, %v1082
        %v1084 = vrot.slane %v1083, 2
        %v1085 = vmax.f32 %v1083, %v1084
        %v1086 = vrot.slane %v1085, 1
        %v1087 = vmax.f32 %v1085, %v1086
        %v1088 = vsel %vm376, %v1068, -inf
        %v1089 = vrot.slane %v1088, 4
        %v1090 = vmax.f32 %v1088, %v1089
        %v1091 = vrot.slane %v1090, 2
        %v1092 = vmax.f32 %v1090, %v1091
        %v1093 = vrot.slane %v1092, 1
        %v1094 = vmax.f32 %v1092, %v1093
        %v1095 = vsel %vm376, %v1069, -inf
        %v1096 = vrot.slane %v1095, 4
        %v1097 = vmax.f32 %v1095, %v1096
        %v1098 = vrot.slane %v1097, 2
        %v1099 = vmax.f32 %v1097, %v1098
        %v1100 = vrot.slane %v1099, 1
        %v1101 = vmax.f32 %v1099, %v1100
        %v1102 = vsel %vm376, %v1070, -inf
        %v1103 = vrot.slane %v1102, 4
        %v1104 = vmax.f32 %v1102, %v1103
        %v1105 = vrot.slane %v1104, 2
        %v1106 = vmax.f32 %v1104, %v1105
        %v1107 = vrot.slane %v1106, 1
        %v1108 = vmax.f32 %v1106, %v1107
        %v1109 = vsel %vm376, %v1071, -inf
        %v1110 = vrot.slane %v1109, 4
        %v1111 = vmax.f32 %v1109, %v1110
        %v1112 = vrot.slane %v1111, 2
        %v1113 = vmax.f32 %v1111, %v1112
        %v1114 = vrot.slane %v1113, 1
        %v1115 = vmax.f32 %v1113, %v1114
        %v1116 = vsel %vm376, %v1072, -inf
        %v1117 = vrot.slane %v1116, 4
        %v1118 = vmax.f32 %v1116, %v1117
        %v1119 = vrot.slane %v1118, 2
        %v1120 = vmax.f32 %v1118, %v1119
        %v1121 = vrot.slane %v1120, 1
        %v1122 = vmax.f32 %v1120, %v1121
        %v1123 = vsel %vm376, %v1073, -inf
        %v1124 = vrot.slane %v1123, 4
        %v1125 = vmax.f32 %v1123, %v1124
        %v1126 = vrot.slane %v1125, 2
        %v1127 = vmax.f32 %v1125, %v1126
        %v1128 = vrot.slane %v1127, 1
        %v1129 = vmax.f32 %v1127, %v1128
        %v1138 = vsel %vm441, %v1087, %v1080
        %v1139 = vsel %vm443, %v1094, %v1138
        %v1140 = vsel %vm445, %v1101, %v1139
        %v1141 = vsel %vm447, %v1108, %v1140
        %v1142 = vsel %vm449, %v1115, %v1141
        %v1143 = vsel %vm451, %v1122, %v1142
        %v1144 = vsel %vm453, %v1129, %v1143
        %v1146 = vmax.f32 %v1008, %v1144
        %v1147 = vld [vmem:[%s196 + $0x30] sm:$0xff]
        %s1149 = sor.u32 256, 48
        %1150 = vbcast.lane.b32.xlu0 %v291, %s1149
        %v1151 = vpop.permute.xlu0 %1150
        %s1153 = sor.u32 256, 48
        %1154 = vbcast.lane.b32.xlu0 %v298, %s1153
        %v1155 = vpop.permute.xlu0 %1154
        %s1157 = sor.u32 256, 48
        %1158 = vbcast.lane.b32.xlu0 %v305, %s1157
        %v1159 = vpop.permute.xlu0 %1158
        %s1161 = sor.u32 256, 48
        %1162 = vbcast.lane.b32.xlu0 %v312, %s1161
        %v1163 = vpop.permute.xlu0 %1162
        %s1165 = sor.u32 256, 48
        %1166 = vbcast.lane.b32.xlu0 %v319, %s1165
        %v1167 = vpop.permute.xlu0 %1166
        %s1169 = sor.u32 256, 48
        %1170 = vbcast.lane.b32.xlu0 %v326, %s1169
        %v1171 = vpop.permute.xlu0 %1170
        %s1173 = sor.u32 256, 48
        %1174 = vbcast.lane.b32.xlu0 %v333, %s1173
        %v1175 = vpop.permute.xlu0 %1174
        %s1177 = sor.u32 256, 48
        %1178 = vbcast.lane.b32.xlu0 %v340, %s1177
        %v1179 = vpop.permute.xlu0 %1178
        %vm1180 = vcmp.gt.f32.partialorder %v1151, 0.0
        %vm1181 = vcmp.gt.f32.partialorder %v1155, 0.0
        %vm1182 = vcmp.gt.f32.partialorder %v1159, 0.0
        %vm1183 = vcmp.gt.f32.partialorder %v1163, 0.0
        %vm1184 = vcmp.gt.f32.partialorder %v1167, 0.0
        %vm1185 = vcmp.gt.f32.partialorder %v1171, 0.0
        %vm1186 = vcmp.gt.f32.partialorder %v1175, 0.0
        %vm1187 = vcmp.gt.f32.partialorder %v1179, 0.0
        %v1188 = vsel %vm1180, 1, 0
        %v1189 = vsel %vm1181, 1, 0
        %v1190 = vsel %vm1182, 1, 0
        %v1191 = vsel %vm1183, 1, 0
        %v1192 = vsel %vm1184, 1, 0
        %v1193 = vsel %vm1185, 1, 0
        %v1194 = vsel %vm1186, 1, 0
        %v1195 = vsel %vm1187, 1, 0
        %vm1196 = vcmp.eq.s32.totalorder %v1188, 1
        %vm1197 = vcmp.eq.s32.totalorder %v1189, 1
        %vm1198 = vcmp.eq.s32.totalorder %v1190, 1
        %vm1199 = vcmp.eq.s32.totalorder %v1191, 1
        %vm1200 = vcmp.eq.s32.totalorder %v1192, 1
        %vm1201 = vcmp.eq.s32.totalorder %v1193, 1
        %vm1202 = vcmp.eq.s32.totalorder %v1194, 1
        %vm1203 = vcmp.eq.s32.totalorder %v1195, 1
        %v1204 = vsel %vm1196, %v1147, -30000.0
        %v1205 = vsel %vm1197, %v1147, -30000.0
        %v1206 = vsel %vm1198, %v1147, -30000.0
        %v1207 = vsel %vm1199, %v1147, -30000.0
        %v1208 = vsel %vm1200, %v1147, -30000.0
        %v1209 = vsel %vm1201, %v1147, -30000.0
        %v1210 = vsel %vm1202, %v1147, -30000.0
        %v1211 = vsel %vm1203, %v1147, -30000.0
        %v1212 = vsel %vm376, %v1204, -inf
        %v1213 = vrot.slane %v1212, 4
        %v1214 = vmax.f32 %v1212, %v1213
        %v1215 = vrot.slane %v1214, 2
        %v1216 = vmax.f32 %v1214, %v1215
        %v1217 = vrot.slane %v1216, 1
        %v1218 = vmax.f32 %v1216, %v1217
        %v1219 = vsel %vm376, %v1205, -inf
        %v1220 = vrot.slane %v1219, 4
        %v1221 = vmax.f32 %v1219, %v1220
        %v1222 = vrot.slane %v1221, 2
        %v1223 = vmax.f32 %v1221, %v1222
        %v1224 = vrot.slane %v1223, 1
        %v1225 = vmax.f32 %v1223, %v1224
        %v1226 = vsel %vm376, %v1206, -inf
        %v1227 = vrot.slane %v1226, 4
        %v1228 = vmax.f32 %v1226, %v1227
        %v1229 = vrot.slane %v1228, 2
        %v1230 = vmax.f32 %v1228, %v1229
        %v1231 = vrot.slane %v1230, 1
        %v1232 = vmax.f32 %v1230, %v1231
        %v1233 = vsel %vm376, %v1207, -inf
        %v1234 = vrot.slane %v1233, 4
        %v1235 = vmax.f32 %v1233, %v1234
        %v1236 = vrot.slane %v1235, 2
        %v1237 = vmax.f32 %v1235, %v1236
        %v1238 = vrot.slane %v1237, 1
        %v1239 = vmax.f32 %v1237, %v1238
        %v1240 = vsel %vm376, %v1208, -inf
        %v1241 = vrot.slane %v1240, 4
        %v1242 = vmax.f32 %v1240, %v1241
        %v1243 = vrot.slane %v1242, 2
        %v1244 = vmax.f32 %v1242, %v1243
        %v1245 = vrot.slane %v1244, 1
        %v1246 = vmax.f32 %v1244, %v1245
        %v1247 = vsel %vm376, %v1209, -inf
        %v1248 = vrot.slane %v1247, 4
        %v1249 = vmax.f32 %v1247, %v1248
        %v1250 = vrot.slane %v1249, 2
        %v1251 = vmax.f32 %v1249, %v1250
        %v1252 = vrot.slane %v1251, 1
        %v1253 = vmax.f32 %v1251, %v1252
        %v1254 = vsel %vm376, %v1210, -inf
        %v1255 = vrot.slane %v1254, 4
        %v1256 = vmax.f32 %v1254, %v1255
        %v1257 = vrot.slane %v1256, 2
        %v1258 = vmax.f32 %v1256, %v1257
        %v1259 = vrot.slane %v1258, 1
        %v1260 = vmax.f32 %v1258, %v1259
        %v1261 = vsel %vm376, %v1211, -inf
        %v1262 = vrot.slane %v1261, 4
        %v1263 = vmax.f32 %v1261, %v1262
        %v1264 = vrot.slane %v1263, 2
        %v1265 = vmax.f32 %v1263, %v1264
        %v1266 = vrot.slane %v1265, 1
        %v1267 = vmax.f32 %v1265, %v1266
        %v1276 = vsel %vm441, %v1225, %v1218
        %v1277 = vsel %vm443, %v1232, %v1276
        %v1278 = vsel %vm445, %v1239, %v1277
        %v1279 = vsel %vm447, %v1246, %v1278
        %v1280 = vsel %vm449, %v1253, %v1279
        %v1281 = vsel %vm451, %v1260, %v1280
        %v1282 = vsel %vm453, %v1267, %v1281
        %v1284 = vmax.f32 %v1146, %v1282
        %v1285 = vld [vmem:[%s196 + $0x38] sm:$0xff]
        %s1287 = sor.u32 256, 56
        %1288 = vbcast.lane.b32.xlu0 %v291, %s1287
        %v1289 = vpop.permute.xlu0 %1288
        %s1291 = sor.u32 256, 56
        %1292 = vbcast.lane.b32.xlu0 %v298, %s1291
        %v1293 = vpop.permute.xlu0 %1292
        %s1295 = sor.u32 256, 56
        %1296 = vbcast.lane.b32.xlu0 %v305, %s1295
        %v1297 = vpop.permute.xlu0 %1296
        %s1299 = sor.u32 256, 56
        %1300 = vbcast.lane.b32.xlu0 %v312, %s1299
        %v1301 = vpop.permute.xlu0 %1300
        %s1303 = sor.u32 256, 56
        %1304 = vbcast.lane.b32.xlu0 %v319, %s1303
        %v1305 = vpop.permute.xlu0 %1304
        %s1307 = sor.u32 256, 56
        %1308 = vbcast.lane.b32.xlu0 %v326, %s1307
        %v1309 = vpop.permute.xlu0 %1308
        %s1311 = sor.u32 256, 56
        %1312 = vbcast.lane.b32.xlu0 %v333, %s1311
        %v1313 = vpop.permute.xlu0 %1312
        %s1315 = sor.u32 256, 56
        %1316 = vbcast.lane.b32.xlu0 %v340, %s1315
        %v1317 = vpop.permute.xlu0 %1316
        %vm1318 = vcmp.gt.f32.partialorder %v1289, 0.0
        %vm1319 = vcmp.gt.f32.partialorder %v1293, 0.0
        %vm1320 = vcmp.gt.f32.partialorder %v1297, 0.0
        %vm1321 = vcmp.gt.f32.partialorder %v1301, 0.0
        %vm1322 = vcmp.gt.f32.partialorder %v1305, 0.0
        %vm1323 = vcmp.gt.f32.partialorder %v1309, 0.0
        %vm1324 = vcmp.gt.f32.partialorder %v1313, 0.0
        %vm1325 = vcmp.gt.f32.partialorder %v1317, 0.0
        %v1326 = vsel %vm1318, 1, 0
        %v1327 = vsel %vm1319, 1, 0
        %v1328 = vsel %vm1320, 1, 0
        %v1329 = vsel %vm1321, 1, 0
        %v1330 = vsel %vm1322, 1, 0
        %v1331 = vsel %vm1323, 1, 0
        %v1332 = vsel %vm1324, 1, 0
        %v1333 = vsel %vm1325, 1, 0
        %vm1334 = vcmp.eq.s32.totalorder %v1326, 1
        %vm1335 = vcmp.eq.s32.totalorder %v1327, 1
        %vm1336 = vcmp.eq.s32.totalorder %v1328, 1
        %vm1337 = vcmp.eq.s32.totalorder %v1329, 1
        %vm1338 = vcmp.eq.s32.totalorder %v1330, 1
        %vm1339 = vcmp.eq.s32.totalorder %v1331, 1
        %vm1340 = vcmp.eq.s32.totalorder %v1332, 1
        %vm1341 = vcmp.eq.s32.totalorder %v1333, 1
        %v1342 = vsel %vm1334, %v1285, -30000.0
        %v1343 = vsel %vm1335, %v1285, -30000.0
        %v1344 = vsel %vm1336, %v1285, -30000.0
        %v1345 = vsel %vm1337, %v1285, -30000.0
        %v1346 = vsel %vm1338, %v1285, -30000.0
        %v1347 = vsel %vm1339, %v1285, -30000.0
        %v1348 = vsel %vm1340, %v1285, -30000.0
        %v1349 = vsel %vm1341, %v1285, -30000.0
        %v1350 = vsel %vm376, %v1342, -inf
        %v1351 = vrot.slane %v1350, 4
        %v1352 = vmax.f32 %v1350, %v1351
        %v1353 = vrot.slane %v1352, 2
        %v1354 = vmax.f32 %v1352, %v1353
        %v1355 = vrot.slane %v1354, 1
        %v1356 = vmax.f32 %v1354, %v1355
        %v1357 = vsel %vm376, %v1343, -inf
        %v1358 = vrot.slane %v1357, 4
        %v1359 = vmax.f32 %v1357, %v1358
        %v1360 = vrot.slane %v1359, 2
        %v1361 = vmax.f32 %v1359, %v1360
        %v1362 = vrot.slane %v1361, 1
        %v1363 = vmax.f32 %v1361, %v1362
        %v1364 = vsel %vm376, %v1344, -inf
        %v1365 = vrot.slane %v1364, 4
        %v1366 = vmax.f32 %v1364, %v1365
        %v1367 = vrot.slane %v1366, 2
        %v1368 = vmax.f32 %v1366, %v1367
        %v1369 = vrot.slane %v1368, 1
        %v1370 = vmax.f32 %v1368, %v1369
        %v1371 = vsel %vm376, %v1345, -inf
        %v1372 = vrot.slane %v1371, 4
        %v1373 = vmax.f32 %v1371, %v1372
        %v1374 = vrot.slane %v1373, 2
        %v1375 = vmax.f32 %v1373, %v1374
        %v1376 = vrot.slane %v1375, 1
        %v1377 = vmax.f32 %v1375, %v1376
        %v1378 = vsel %vm376, %v1346, -inf
        %v1379 = vrot.slane %v1378, 4
        %v1380 = vmax.f32 %v1378, %v1379
        %v1381 = vrot.slane %v1380, 2
        %v1382 = vmax.f32 %v1380, %v1381
        %v1383 = vrot.slane %v1382, 1
        %v1384 = vmax.f32 %v1382, %v1383
        %v1385 = vsel %vm376, %v1347, -inf
        %v1386 = vrot.slane %v1385, 4
        %v1387 = vmax.f32 %v1385, %v1386
        %v1388 = vrot.slane %v1387, 2
        %v1389 = vmax.f32 %v1387, %v1388
        %v1390 = vrot.slane %v1389, 1
        %v1391 = vmax.f32 %v1389, %v1390
        %v1392 = vsel %vm376, %v1348, -inf
        %v1393 = vrot.slane %v1392, 4
        %v1394 = vmax.f32 %v1392, %v1393
        %v1395 = vrot.slane %v1394, 2
        %v1396 = vmax.f32 %v1394, %v1395
        %v1397 = vrot.slane %v1396, 1
        %v1398 = vmax.f32 %v1396, %v1397
        %v1399 = vsel %vm376, %v1349, -inf
        %v1400 = vrot.slane %v1399, 4
        %v1401 = vmax.f32 %v1399, %v1400
        %v1402 = vrot.slane %v1401, 2
        %v1403 = vmax.f32 %v1401, %v1402
        %v1404 = vrot.slane %v1403, 1
        %v1405 = vmax.f32 %v1403, %v1404
        %v1414 = vsel %vm441, %v1363, %v1356
        %v1415 = vsel %vm443, %v1370, %v1414
        %v1416 = vsel %vm445, %v1377, %v1415
        %v1417 = vsel %vm447, %v1384, %v1416
        %v1418 = vsel %vm449, %v1391, %v1417
        %v1419 = vsel %vm451, %v1398, %v1418
        %v1420 = vsel %vm453, %v1405, %v1419
        %v1422 = vmax.f32 %v1284, %v1420
        %v1423 = vld [vmem:[%s196 + $0x40] sm:$0xff]
        %s1425 = sor.u32 256, 64
        %1426 = vbcast.lane.b32.xlu0 %v291, %s1425
        %v1427 = vpop.permute.xlu0 %1426
        %s1429 = sor.u32 256, 64
        %1430 = vbcast.lane.b32.xlu0 %v298, %s1429
        %v1431 = vpop.permute.xlu0 %1430
        %s1433 = sor.u32 256, 64
        %1434 = vbcast.lane.b32.xlu0 %v305, %s1433
        %v1435 = vpop.permute.xlu0 %1434
        %s1437 = sor.u32 256, 64
        %1438 = vbcast.lane.b32.xlu0 %v312, %s1437
        %v1439 = vpop.permute.xlu0 %1438
        %s1441 = sor.u32 256, 64
        %1442 = vbcast.lane.b32.xlu0 %v319, %s1441
        %v1443 = vpop.permute.xlu0 %1442
        %s1445 = sor.u32 256, 64
        %1446 = vbcast.lane.b32.xlu0 %v326, %s1445
        %v1447 = vpop.permute.xlu0 %1446
        %s1449 = sor.u32 256, 64
        %1450 = vbcast.lane.b32.xlu0 %v333, %s1449
        %v1451 = vpop.permute.xlu0 %1450
        %s1453 = sor.u32 256, 64
        %1454 = vbcast.lane.b32.xlu0 %v340, %s1453
        %v1455 = vpop.permute.xlu0 %1454
        %vm1456 = vcmp.gt.f32.partialorder %v1427, 0.0
        %vm1457 = vcmp.gt.f32.partialorder %v1431, 0.0
        %vm1458 = vcmp.gt.f32.partialorder %v1435, 0.0
        %vm1459 = vcmp.gt.f32.partialorder %v1439, 0.0
        %vm1460 = vcmp.gt.f32.partialorder %v1443, 0.0
        %vm1461 = vcmp.gt.f32.partialorder %v1447, 0.0
        %vm1462 = vcmp.gt.f32.partialorder %v1451, 0.0
        %vm1463 = vcmp.gt.f32.partialorder %v1455, 0.0
        %v1464 = vsel %vm1456, 1, 0
        %v1465 = vsel %vm1457, 1, 0
        %v1466 = vsel %vm1458, 1, 0
        %v1467 = vsel %vm1459, 1, 0
        %v1468 = vsel %vm1460, 1, 0
        %v1469 = vsel %vm1461, 1, 0
        %v1470 = vsel %vm1462, 1, 0
        %v1471 = vsel %vm1463, 1, 0
        %vm1472 = vcmp.eq.s32.totalorder %v1464, 1
        %vm1473 = vcmp.eq.s32.totalorder %v1465, 1
        %vm1474 = vcmp.eq.s32.totalorder %v1466, 1
        %vm1475 = vcmp.eq.s32.totalorder %v1467, 1
        %vm1476 = vcmp.eq.s32.totalorder %v1468, 1
        %vm1477 = vcmp.eq.s32.totalorder %v1469, 1
        %vm1478 = vcmp.eq.s32.totalorder %v1470, 1
        %vm1479 = vcmp.eq.s32.totalorder %v1471, 1
        %v1480 = vsel %vm1472, %v1423, -30000.0
        %v1481 = vsel %vm1473, %v1423, -30000.0
        %v1482 = vsel %vm1474, %v1423, -30000.0
        %v1483 = vsel %vm1475, %v1423, -30000.0
        %v1484 = vsel %vm1476, %v1423, -30000.0
        %v1485 = vsel %vm1477, %v1423, -30000.0
        %v1486 = vsel %vm1478, %v1423, -30000.0
        %v1487 = vsel %vm1479, %v1423, -30000.0
        %v1488 = vsel %vm376, %v1480, -inf
        %v1489 = vrot.slane %v1488, 4
        %v1490 = vmax.f32 %v1488, %v1489
        %v1491 = vrot.slane %v1490, 2
        %v1492 = vmax.f32 %v1490, %v1491
        %v1493 = vrot.slane %v1492, 1
        %v1494 = vmax.f32 %v1492, %v1493
        %v1495 = vsel %vm376, %v1481, -inf
        %v1496 = vrot.slane %v1495, 4
        %v1497 = vmax.f32 %v1495, %v1496
        %v1498 = vrot.slane %v1497, 2
        %v1499 = vmax.f32 %v1497, %v1498
        %v1500 = vrot.slane %v1499, 1
        %v1501 = vmax.f32 %v1499, %v1500
        %v1502 = vsel %vm376, %v1482, -inf
        %v1503 = vrot.slane %v1502, 4
        %v1504 = vmax.f32 %v1502, %v1503
        %v1505 = vrot.slane %v1504, 2
        %v1506 = vmax.f32 %v1504, %v1505
        %v1507 = vrot.slane %v1506, 1
        %v1508 = vmax.f32 %v1506, %v1507
        %v1509 = vsel %vm376, %v1483, -inf
        %v1510 = vrot.slane %v1509, 4
        %v1511 = vmax.f32 %v1509, %v1510
        %v1512 = vrot.slane %v1511, 2
        %v1513 = vmax.f32 %v1511, %v1512
        %v1514 = vrot.slane %v1513, 1
        %v1515 = vmax.f32 %v1513, %v1514
        %v1516 = vsel %vm376, %v1484, -inf
        %v1517 = vrot.slane %v1516, 4
        %v1518 = vmax.f32 %v1516, %v1517
        %v1519 = vrot.slane %v1518, 2
        %v1520 = vmax.f32 %v1518, %v1519
        %v1521 = vrot.slane %v1520, 1
        %v1522 = vmax.f32 %v1520, %v1521
        %v1523 = vsel %vm376, %v1485, -inf
        %v1524 = vrot.slane %v1523, 4
        %v1525 = vmax.f32 %v1523, %v1524
        %v1526 = vrot.slane %v1525, 2
        %v1527 = vmax.f32 %v1525, %v1526
        %v1528 = vrot.slane %v1527, 1
        %v1529 = vmax.f32 %v1527, %v1528
        %v1530 = vsel %vm376, %v1486, -inf
        %v1531 = vrot.slane %v1530, 4
        %v1532 = vmax.f32 %v1530, %v1531
        %v1533 = vrot.slane %v1532, 2
        %v1534 = vmax.f32 %v1532, %v1533
        %v1535 = vrot.slane %v1534, 1
        %v1536 = vmax.f32 %v1534, %v1535
        %v1537 = vsel %vm376, %v1487, -inf
        %v1538 = vrot.slane %v1537, 4
        %v1539 = vmax.f32 %v1537, %v1538
        %v1540 = vrot.slane %v1539, 2
        %v1541 = vmax.f32 %v1539, %v1540
        %v1542 = vrot.slane %v1541, 1
        %v1543 = vmax.f32 %v1541, %v1542
        %v1552 = vsel %vm441, %v1501, %v1494
        %v1553 = vsel %vm443, %v1508, %v1552
        %v1554 = vsel %vm445, %v1515, %v1553
        %v1555 = vsel %vm447, %v1522, %v1554
        %v1556 = vsel %vm449, %v1529, %v1555
        %v1557 = vsel %vm451, %v1536, %v1556
        %v1558 = vsel %vm453, %v1543, %v1557
        %v1560 = vmax.f32 %v1422, %v1558
        %v1561 = vld [vmem:[%s196 + $0x48] sm:$0xff]
        %s1563 = sor.u32 256, 72
        %1564 = vbcast.lane.b32.xlu0 %v291, %s1563
        %v1565 = vpop.permute.xlu0 %1564
        %s1567 = sor.u32 256, 72
        %1568 = vbcast.lane.b32.xlu0 %v298, %s1567
        %v1569 = vpop.permute.xlu0 %1568
        %s1571 = sor.u32 256, 72
        %1572 = vbcast.lane.b32.xlu0 %v305, %s1571
        %v1573 = vpop.permute.xlu0 %1572
        %s1575 = sor.u32 256, 72
        %1576 = vbcast.lane.b32.xlu0 %v312, %s1575
        %v1577 = vpop.permute.xlu0 %1576
        %s1579 = sor.u32 256, 72
        %1580 = vbcast.lane.b32.xlu0 %v319, %s1579
        %v1581 = vpop.permute.xlu0 %1580
        %s1583 = sor.u32 256, 72
        %1584 = vbcast.lane.b32.xlu0 %v326, %s1583
        %v1585 = vpop.permute.xlu0 %1584
        %s1587 = sor.u32 256, 72
        %1588 = vbcast.lane.b32.xlu0 %v333, %s1587
        %v1589 = vpop.permute.xlu0 %1588
        %s1591 = sor.u32 256, 72
        %1592 = vbcast.lane.b32.xlu0 %v340, %s1591
        %v1593 = vpop.permute.xlu0 %1592
        %vm1594 = vcmp.gt.f32.partialorder %v1565, 0.0
        %vm1595 = vcmp.gt.f32.partialorder %v1569, 0.0
        %vm1596 = vcmp.gt.f32.partialorder %v1573, 0.0
        %vm1597 = vcmp.gt.f32.partialorder %v1577, 0.0
        %vm1598 = vcmp.gt.f32.partialorder %v1581, 0.0
        %vm1599 = vcmp.gt.f32.partialorder %v1585, 0.0
        %vm1600 = vcmp.gt.f32.partialorder %v1589, 0.0
        %vm1601 = vcmp.gt.f32.partialorder %v1593, 0.0
        %v1602 = vsel %vm1594, 1, 0
        %v1603 = vsel %vm1595, 1, 0
        %v1604 = vsel %vm1596, 1, 0
        %v1605 = vsel %vm1597, 1, 0
        %v1606 = vsel %vm1598, 1, 0
        %v1607 = vsel %vm1599, 1, 0
        %v1608 = vsel %vm1600, 1, 0
        %v1609 = vsel %vm1601, 1, 0
        %vm1610 = vcmp.eq.s32.totalorder %v1602, 1
        %vm1611 = vcmp.eq.s32.totalorder %v1603, 1
        %vm1612 = vcmp.eq.s32.totalorder %v1604, 1
        %vm1613 = vcmp.eq.s32.totalorder %v1605, 1
        %vm1614 = vcmp.eq.s32.totalorder %v1606, 1
        %vm1615 = vcmp.eq.s32.totalorder %v1607, 1
        %vm1616 = vcmp.eq.s32.totalorder %v1608, 1
        %vm1617 = vcmp.eq.s32.totalorder %v1609, 1
        %v1618 = vsel %vm1610, %v1561, -30000.0
        %v1619 = vsel %vm1611, %v1561, -30000.0
        %v1620 = vsel %vm1612, %v1561, -30000.0
        %v1621 = vsel %vm1613, %v1561, -30000.0
        %v1622 = vsel %vm1614, %v1561, -30000.0
        %v1623 = vsel %vm1615, %v1561, -30000.0
        %v1624 = vsel %vm1616, %v1561, -30000.0
        %v1625 = vsel %vm1617, %v1561, -30000.0
        %v1626 = vsel %vm376, %v1618, -inf
        %v1627 = vrot.slane %v1626, 4
        %v1628 = vmax.f32 %v1626, %v1627
        %v1629 = vrot.slane %v1628, 2
        %v1630 = vmax.f32 %v1628, %v1629
        %v1631 = vrot.slane %v1630, 1
        %v1632 = vmax.f32 %v1630, %v1631
        %v1633 = vsel %vm376, %v1619, -inf
        %v1634 = vrot.slane %v1633, 4
        %v1635 = vmax.f32 %v1633, %v1634
        %v1636 = vrot.slane %v1635, 2
        %v1637 = vmax.f32 %v1635, %v1636
        %v1638 = vrot.slane %v1637, 1
        %v1639 = vmax.f32 %v1637, %v1638
        %v1640 = vsel %vm376, %v1620, -inf
        %v1641 = vrot.slane %v1640, 4
        %v1642 = vmax.f32 %v1640, %v1641
        %v1643 = vrot.slane %v1642, 2
        %v1644 = vmax.f32 %v1642, %v1643
        %v1645 = vrot.slane %v1644, 1
        %v1646 = vmax.f32 %v1644, %v1645
        %v1647 = vsel %vm376, %v1621, -inf
        %v1648 = vrot.slane %v1647, 4
        %v1649 = vmax.f32 %v1647, %v1648
        %v1650 = vrot.slane %v1649, 2
        %v1651 = vmax.f32 %v1649, %v1650
        %v1652 = vrot.slane %v1651, 1
        %v1653 = vmax.f32 %v1651, %v1652
        %v1654 = vsel %vm376, %v1622, -inf
        %v1655 = vrot.slane %v1654, 4
        %v1656 = vmax.f32 %v1654, %v1655
        %v1657 = vrot.slane %v1656, 2
        %v1658 = vmax.f32 %v1656, %v1657
        %v1659 = vrot.slane %v1658, 1
        %v1660 = vmax.f32 %v1658, %v1659
        %v1661 = vsel %vm376, %v1623, -inf
        %v1662 = vrot.slane %v1661, 4
        %v1663 = vmax.f32 %v1661, %v1662
        %v1664 = vrot.slane %v1663, 2
        %v1665 = vmax.f32 %v1663, %v1664
        %v1666 = vrot.slane %v1665, 1
        %v1667 = vmax.f32 %v1665, %v1666
        %v1668 = vsel %vm376, %v1624, -inf
        %v1669 = vrot.slane %v1668, 4
        %v1670 = vmax.f32 %v1668, %v1669
        %v1671 = vrot.slane %v1670, 2
        %v1672 = vmax.f32 %v1670, %v1671
        %v1673 = vrot.slane %v1672, 1
        %v1674 = vmax.f32 %v1672, %v1673
        %v1675 = vsel %vm376, %v1625, -inf
        %v1676 = vrot.slane %v1675, 4
        %v1677 = vmax.f32 %v1675, %v1676
        %v1678 = vrot.slane %v1677, 2
        %v1679 = vmax.f32 %v1677, %v1678
        %v1680 = vrot.slane %v1679, 1
        %v1681 = vmax.f32 %v1679, %v1680
        %v1690 = vsel %vm441, %v1639, %v1632
        %v1691 = vsel %vm443, %v1646, %v1690
        %v1692 = vsel %vm445, %v1653, %v1691
        %v1693 = vsel %vm447, %v1660, %v1692
        %v1694 = vsel %vm449, %v1667, %v1693
        %v1695 = vsel %vm451, %v1674, %v1694
        %v1696 = vsel %vm453, %v1681, %v1695
        %v1698 = vmax.f32 %v1560, %v1696
        %v1699 = vld [vmem:[%s196 + $0x50] sm:$0xff]
        %s1701 = sor.u32 256, 80
        %1702 = vbcast.lane.b32.xlu0 %v291, %s1701
        %v1703 = vpop.permute.xlu0 %1702
        %s1705 = sor.u32 256, 80
        %1706 = vbcast.lane.b32.xlu0 %v298, %s1705
        %v1707 = vpop.permute.xlu0 %1706
        %s1709 = sor.u32 256, 80
        %1710 = vbcast.lane.b32.xlu0 %v305, %s1709
        %v1711 = vpop.permute.xlu0 %1710
        %s1713 = sor.u32 256, 80
        %1714 = vbcast.lane.b32.xlu0 %v312, %s1713
        %v1715 = vpop.permute.xlu0 %1714
        %s1717 = sor.u32 256, 80
        %1718 = vbcast.lane.b32.xlu0 %v319, %s1717
        %v1719 = vpop.permute.xlu0 %1718
        %s1721 = sor.u32 256, 80
        %1722 = vbcast.lane.b32.xlu0 %v326, %s1721
        %v1723 = vpop.permute.xlu0 %1722
        %s1725 = sor.u32 256, 80
        %1726 = vbcast.lane.b32.xlu0 %v333, %s1725
        %v1727 = vpop.permute.xlu0 %1726
        %s1729 = sor.u32 256, 80
        %1730 = vbcast.lane.b32.xlu0 %v340, %s1729
        %v1731 = vpop.permute.xlu0 %1730
        %vm1732 = vcmp.gt.f32.partialorder %v1703, 0.0
        %vm1733 = vcmp.gt.f32.partialorder %v1707, 0.0
        %vm1734 = vcmp.gt.f32.partialorder %v1711, 0.0
        %vm1735 = vcmp.gt.f32.partialorder %v1715, 0.0
        %vm1736 = vcmp.gt.f32.partialorder %v1719, 0.0
        %vm1737 = vcmp.gt.f32.partialorder %v1723, 0.0
        %vm1738 = vcmp.gt.f32.partialorder %v1727, 0.0
        %vm1739 = vcmp.gt.f32.partialorder %v1731, 0.0
        %v1740 = vsel %vm1732, 1, 0
        %v1741 = vsel %vm1733, 1, 0
        %v1742 = vsel %vm1734, 1, 0
        %v1743 = vsel %vm1735, 1, 0
        %v1744 = vsel %vm1736, 1, 0
        %v1745 = vsel %vm1737, 1, 0
        %v1746 = vsel %vm1738, 1, 0
        %v1747 = vsel %vm1739, 1, 0
        %vm1748 = vcmp.eq.s32.totalorder %v1740, 1
        %vm1749 = vcmp.eq.s32.totalorder %v1741, 1
        %vm1750 = vcmp.eq.s32.totalorder %v1742, 1
        %vm1751 = vcmp.eq.s32.totalorder %v1743, 1
        %vm1752 = vcmp.eq.s32.totalorder %v1744, 1
        %vm1753 = vcmp.eq.s32.totalorder %v1745, 1
        %vm1754 = vcmp.eq.s32.totalorder %v1746, 1
        %vm1755 = vcmp.eq.s32.totalorder %v1747, 1
        %v1756 = vsel %vm1748, %v1699, -30000.0
        %v1757 = vsel %vm1749, %v1699, -30000.0
        %v1758 = vsel %vm1750, %v1699, -30000.0
        %v1759 = vsel %vm1751, %v1699, -30000.0
        %v1760 = vsel %vm1752, %v1699, -30000.0
        %v1761 = vsel %vm1753, %v1699, -30000.0
        %v1762 = vsel %vm1754, %v1699, -30000.0
        %v1763 = vsel %vm1755, %v1699, -30000.0
        %v1764 = vsel %vm376, %v1756, -inf
        %v1765 = vrot.slane %v1764, 4
        %v1766 = vmax.f32 %v1764, %v1765
        %v1767 = vrot.slane %v1766, 2
        %v1768 = vmax.f32 %v1766, %v1767
        %v1769 = vrot.slane %v1768, 1
        %v1770 = vmax.f32 %v1768, %v1769
        %v1771 = vsel %vm376, %v1757, -inf
        %v1772 = vrot.slane %v1771, 4
        %v1773 = vmax.f32 %v1771, %v1772
        %v1774 = vrot.slane %v1773, 2
        %v1775 = vmax.f32 %v1773, %v1774
        %v1776 = vrot.slane %v1775, 1
        %v1777 = vmax.f32 %v1775, %v1776
        %v1778 = vsel %vm376, %v1758, -inf
        %v1779 = vrot.slane %v1778, 4
        %v1780 = vmax.f32 %v1778, %v1779
        %v1781 = vrot.slane %v1780, 2
        %v1782 = vmax.f32 %v1780, %v1781
        %v1783 = vrot.slane %v1782, 1
        %v1784 = vmax.f32 %v1782, %v1783
        %v1785 = vsel %vm376, %v1759, -inf
        %v1786 = vrot.slane %v1785, 4
        %v1787 = vmax.f32 %v1785, %v1786
        %v1788 = vrot.slane %v1787, 2
        %v1789 = vmax.f32 %v1787, %v1788
        %v1790 = vrot.slane %v1789, 1
        %v1791 = vmax.f32 %v1789, %v1790
        %v1792 = vsel %vm376, %v1760, -inf
        %v1793 = vrot.slane %v1792, 4
        %v1794 = vmax.f32 %v1792, %v1793
        %v1795 = vrot.slane %v1794, 2
        %v1796 = vmax.f32 %v1794, %v1795
        %v1797 = vrot.slane %v1796, 1
        %v1798 = vmax.f32 %v1796, %v1797
        %v1799 = vsel %vm376, %v1761, -inf
        %v1800 = vrot.slane %v1799, 4
        %v1801 = vmax.f32 %v1799, %v1800
        %v1802 = vrot.slane %v1801, 2
        %v1803 = vmax.f32 %v1801, %v1802
        %v1804 = vrot.slane %v1803, 1
        %v1805 = vmax.f32 %v1803, %v1804
        %v1806 = vsel %vm376, %v1762, -inf
        %v1807 = vrot.slane %v1806, 4
        %v1808 = vmax.f32 %v1806, %v1807
        %v1809 = vrot.slane %v1808, 2
        %v1810 = vmax.f32 %v1808, %v1809
        %v1811 = vrot.slane %v1810, 1
        %v1812 = vmax.f32 %v1810, %v1811
        %v1813 = vsel %vm376, %v1763, -inf
        %v1814 = vrot.slane %v1813, 4
        %v1815 = vmax.f32 %v1813, %v1814
        %v1816 = vrot.slane %v1815, 2
        %v1817 = vmax.f32 %v1815, %v1816
        %v1818 = vrot.slane %v1817, 1
        %v1819 = vmax.f32 %v1817, %v1818
        %v1828 = vsel %vm441, %v1777, %v1770
        %v1829 = vsel %vm443, %v1784, %v1828
        %v1830 = vsel %vm445, %v1791, %v1829
        %v1831 = vsel %vm447, %v1798, %v1830
        %v1832 = vsel %vm449, %v1805, %v1831
        %v1833 = vsel %vm451, %v1812, %v1832
        %v1834 = vsel %vm453, %v1819, %v1833
        %v1836 = vmax.f32 %v1698, %v1834
        %v1837 = vld [vmem:[%s196 + $0x58] sm:$0xff]
        %s1839 = sor.u32 256, 88
        %1840 = vbcast.lane.b32.xlu0 %v291, %s1839
        %v1841 = vpop.permute.xlu0 %1840
        %s1843 = sor.u32 256, 88
        %1844 = vbcast.lane.b32.xlu0 %v298, %s1843
        %v1845 = vpop.permute.xlu0 %1844
        %s1847 = sor.u32 256, 88
        %1848 = vbcast.lane.b32.xlu0 %v305, %s1847
        %v1849 = vpop.permute.xlu0 %1848
        %s1851 = sor.u32 256, 88
        %1852 = vbcast.lane.b32.xlu0 %v312, %s1851
        %v1853 = vpop.permute.xlu0 %1852
        %s1855 = sor.u32 256, 88
        %1856 = vbcast.lane.b32.xlu0 %v319, %s1855
        %v1857 = vpop.permute.xlu0 %1856
        %s1859 = sor.u32 256, 88
        %1860 = vbcast.lane.b32.xlu0 %v326, %s1859
        %v1861 = vpop.permute.xlu0 %1860
        %s1863 = sor.u32 256, 88
        %1864 = vbcast.lane.b32.xlu0 %v333, %s1863
        %v1865 = vpop.permute.xlu0 %1864
        %s1867 = sor.u32 256, 88
        %1868 = vbcast.lane.b32.xlu0 %v340, %s1867
        %v1869 = vpop.permute.xlu0 %1868
        %vm1870 = vcmp.gt.f32.partialorder %v1841, 0.0
        %vm1871 = vcmp.gt.f32.partialorder %v1845, 0.0
        %vm1872 = vcmp.gt.f32.partialorder %v1849, 0.0
        %vm1873 = vcmp.gt.f32.partialorder %v1853, 0.0
        %vm1874 = vcmp.gt.f32.partialorder %v1857, 0.0
        %vm1875 = vcmp.gt.f32.partialorder %v1861, 0.0
        %vm1876 = vcmp.gt.f32.partialorder %v1865, 0.0
        %vm1877 = vcmp.gt.f32.partialorder %v1869, 0.0
        %v1878 = vsel %vm1870, 1, 0
        %v1879 = vsel %vm1871, 1, 0
        %v1880 = vsel %vm1872, 1, 0
        %v1881 = vsel %vm1873, 1, 0
        %v1882 = vsel %vm1874, 1, 0
        %v1883 = vsel %vm1875, 1, 0
        %v1884 = vsel %vm1876, 1, 0
        %v1885 = vsel %vm1877, 1, 0
        %vm1886 = vcmp.eq.s32.totalorder %v1878, 1
        %vm1887 = vcmp.eq.s32.totalorder %v1879, 1
        %vm1888 = vcmp.eq.s32.totalorder %v1880, 1
        %vm1889 = vcmp.eq.s32.totalorder %v1881, 1
        %vm1890 = vcmp.eq.s32.totalorder %v1882, 1
        %vm1891 = vcmp.eq.s32.totalorder %v1883, 1
        %vm1892 = vcmp.eq.s32.totalorder %v1884, 1
        %vm1893 = vcmp.eq.s32.totalorder %v1885, 1
        %v1894 = vsel %vm1886, %v1837, -30000.0
        %v1895 = vsel %vm1887, %v1837, -30000.0
        %v1896 = vsel %vm1888, %v1837, -30000.0
        %v1897 = vsel %vm1889, %v1837, -30000.0
        %v1898 = vsel %vm1890, %v1837, -30000.0
        %v1899 = vsel %vm1891, %v1837, -30000.0
        %v1900 = vsel %vm1892, %v1837, -30000.0
        %v1901 = vsel %vm1893, %v1837, -30000.0
        %v1902 = vsel %vm376, %v1894, -inf
        %v1903 = vrot.slane %v1902, 4
        %v1904 = vmax.f32 %v1902, %v1903
        %v1905 = vrot.slane %v1904, 2
        %v1906 = vmax.f32 %v1904, %v1905
        %v1907 = vrot.slane %v1906, 1
        %v1908 = vmax.f32 %v1906, %v1907
        %v1909 = vsel %vm376, %v1895, -inf
        %v1910 = vrot.slane %v1909, 4
        %v1911 = vmax.f32 %v1909, %v1910
        %v1912 = vrot.slane %v1911, 2
        %v1913 = vmax.f32 %v1911, %v1912
        %v1914 = vrot.slane %v1913, 1
        %v1915 = vmax.f32 %v1913, %v1914
        %v1916 = vsel %vm376, %v1896, -inf
        %v1917 = vrot.slane %v1916, 4
        %v1918 = vmax.f32 %v1916, %v1917
        %v1919 = vrot.slane %v1918, 2
        %v1920 = vmax.f32 %v1918, %v1919
        %v1921 = vrot.slane %v1920, 1
        %v1922 = vmax.f32 %v1920, %v1921
        %v1923 = vsel %vm376, %v1897, -inf
        %v1924 = vrot.slane %v1923, 4
        %v1925 = vmax.f32 %v1923, %v1924
        %v1926 = vrot.slane %v1925, 2
        %v1927 = vmax.f32 %v1925, %v1926
        %v1928 = vrot.slane %v1927, 1
        %v1929 = vmax.f32 %v1927, %v1928
        %v1930 = vsel %vm376, %v1898, -inf
        %v1931 = vrot.slane %v1930, 4
        %v1932 = vmax.f32 %v1930, %v1931
        %v1933 = vrot.slane %v1932, 2
        %v1934 = vmax.f32 %v1932, %v1933
        %v1935 = vrot.slane %v1934, 1
        %v1936 = vmax.f32 %v1934, %v1935
        %v1937 = vsel %vm376, %v1899, -inf
        %v1938 = vrot.slane %v1937, 4
        %v1939 = vmax.f32 %v1937, %v1938
        %v1940 = vrot.slane %v1939, 2
        %v1941 = vmax.f32 %v1939, %v1940
        %v1942 = vrot.slane %v1941, 1
        %v1943 = vmax.f32 %v1941, %v1942
        %v1944 = vsel %vm376, %v1900, -inf
        %v1945 = vrot.slane %v1944, 4
        %v1946 = vmax.f32 %v1944, %v1945
        %v1947 = vrot.slane %v1946, 2
        %v1948 = vmax.f32 %v1946, %v1947
        %v1949 = vrot.slane %v1948, 1
        %v1950 = vmax.f32 %v1948, %v1949
        %v1951 = vsel %vm376, %v1901, -inf
        %v1952 = vrot.slane %v1951, 4
        %v1953 = vmax.f32 %v1951, %v1952
        %v1954 = vrot.slane %v1953, 2
        %v1955 = vmax.f32 %v1953, %v1954
        %v1956 = vrot.slane %v1955, 1
        %v1957 = vmax.f32 %v1955, %v1956
        %v1966 = vsel %vm441, %v1915, %v1908
        %v1967 = vsel %vm443, %v1922, %v1966
        %v1968 = vsel %vm445, %v1929, %v1967
        %v1969 = vsel %vm447, %v1936, %v1968
        %v1970 = vsel %vm449, %v1943, %v1969
        %v1971 = vsel %vm451, %v1950, %v1970
        %v1972 = vsel %vm453, %v1957, %v1971
        %v1974 = vmax.f32 %v1836, %v1972
        %v1975 = vld [vmem:[%s196 + $0x60] sm:$0xff]
        %s1977 = sor.u32 256, 96
        %1978 = vbcast.lane.b32.xlu0 %v291, %s1977
        %v1979 = vpop.permute.xlu0 %1978
        %s1981 = sor.u32 256, 96
        %1982 = vbcast.lane.b32.xlu0 %v298, %s1981
        %v1983 = vpop.permute.xlu0 %1982
        %s1985 = sor.u32 256, 96
        %1986 = vbcast.lane.b32.xlu0 %v305, %s1985
        %v1987 = vpop.permute.xlu0 %1986
        %s1989 = sor.u32 256, 96
        %1990 = vbcast.lane.b32.xlu0 %v312, %s1989
        %v1991 = vpop.permute.xlu0 %1990
        %s1993 = sor.u32 256, 96
        %1994 = vbcast.lane.b32.xlu0 %v319, %s1993
        %v1995 = vpop.permute.xlu0 %1994
        %s1997 = sor.u32 256, 96
        %1998 = vbcast.lane.b32.xlu0 %v326, %s1997
        %v1999 = vpop.permute.xlu0 %1998
        %s2001 = sor.u32 256, 96
        %2002 = vbcast.lane.b32.xlu0 %v333, %s2001
        %v2003 = vpop.permute.xlu0 %2002
        %s2005 = sor.u32 256, 96
        %2006 = vbcast.lane.b32.xlu0 %v340, %s2005
        %v2007 = vpop.permute.xlu0 %2006
        %vm2008 = vcmp.gt.f32.partialorder %v1979, 0.0
        %vm2009 = vcmp.gt.f32.partialorder %v1983, 0.0
        %vm2010 = vcmp.gt.f32.partialorder %v1987, 0.0
        %vm2011 = vcmp.gt.f32.partialorder %v1991, 0.0
        %vm2012 = vcmp.gt.f32.partialorder %v1995, 0.0
        %vm2013 = vcmp.gt.f32.partialorder %v1999, 0.0
        %vm2014 = vcmp.gt.f32.partialorder %v2003, 0.0
        %vm2015 = vcmp.gt.f32.partialorder %v2007, 0.0
        %v2016 = vsel %vm2008, 1, 0
        %v2017 = vsel %vm2009, 1, 0
        %v2018 = vsel %vm2010, 1, 0
        %v2019 = vsel %vm2011, 1, 0
        %v2020 = vsel %vm2012, 1, 0
        %v2021 = vsel %vm2013, 1, 0
        %v2022 = vsel %vm2014, 1, 0
        %v2023 = vsel %vm2015, 1, 0
        %vm2024 = vcmp.eq.s32.totalorder %v2016, 1
        %vm2025 = vcmp.eq.s32.totalorder %v2017, 1
        %vm2026 = vcmp.eq.s32.totalorder %v2018, 1
        %vm2027 = vcmp.eq.s32.totalorder %v2019, 1
        %vm2028 = vcmp.eq.s32.totalorder %v2020, 1
        %vm2029 = vcmp.eq.s32.totalorder %v2021, 1
        %vm2030 = vcmp.eq.s32.totalorder %v2022, 1
        %vm2031 = vcmp.eq.s32.totalorder %v2023, 1
        %v2032 = vsel %vm2024, %v1975, -30000.0
        %v2033 = vsel %vm2025, %v1975, -30000.0
        %v2034 = vsel %vm2026, %v1975, -30000.0
        %v2035 = vsel %vm2027, %v1975, -30000.0
        %v2036 = vsel %vm2028, %v1975, -30000.0
        %v2037 = vsel %vm2029, %v1975, -30000.0
        %v2038 = vsel %vm2030, %v1975, -30000.0
        %v2039 = vsel %vm2031, %v1975, -30000.0
        %v2040 = vsel %vm376, %v2032, -inf
        %v2041 = vrot.slane %v2040, 4
        %v2042 = vmax.f32 %v2040, %v2041
        %v2043 = vrot.slane %v2042, 2
        %v2044 = vmax.f32 %v2042, %v2043
        %v2045 = vrot.slane %v2044, 1
        %v2046 = vmax.f32 %v2044, %v2045
        %v2047 = vsel %vm376, %v2033, -inf
        %v2048 = vrot.slane %v2047, 4
        %v2049 = vmax.f32 %v2047, %v2048
        %v2050 = vrot.slane %v2049, 2
        %v2051 = vmax.f32 %v2049, %v2050
        %v2052 = vrot.slane %v2051, 1
        %v2053 = vmax.f32 %v2051, %v2052
        %v2054 = vsel %vm376, %v2034, -inf
        %v2055 = vrot.slane %v2054, 4
        %v2056 = vmax.f32 %v2054, %v2055
        %v2057 = vrot.slane %v2056, 2
        %v2058 = vmax.f32 %v2056, %v2057
        %v2059 = vrot.slane %v2058, 1
        %v2060 = vmax.f32 %v2058, %v2059
        %v2061 = vsel %vm376, %v2035, -inf
        %v2062 = vrot.slane %v2061, 4
        %v2063 = vmax.f32 %v2061, %v2062
        %v2064 = vrot.slane %v2063, 2
        %v2065 = vmax.f32 %v2063, %v2064
        %v2066 = vrot.slane %v2065, 1
        %v2067 = vmax.f32 %v2065, %v2066
        %v2068 = vsel %vm376, %v2036, -inf
        %v2069 = vrot.slane %v2068, 4
        %v2070 = vmax.f32 %v2068, %v2069
        %v2071 = vrot.slane %v2070, 2
        %v2072 = vmax.f32 %v2070, %v2071
        %v2073 = vrot.slane %v2072, 1
        %v2074 = vmax.f32 %v2072, %v2073
        %v2075 = vsel %vm376, %v2037, -inf
        %v2076 = vrot.slane %v2075, 4
        %v2077 = vmax.f32 %v2075, %v2076
        %v2078 = vrot.slane %v2077, 2
        %v2079 = vmax.f32 %v2077, %v2078
        %v2080 = vrot.slane %v2079, 1
        %v2081 = vmax.f32 %v2079, %v2080
        %v2082 = vsel %vm376, %v2038, -inf
        %v2083 = vrot.slane %v2082, 4
        %v2084 = vmax.f32 %v2082, %v2083
        %v2085 = vrot.slane %v2084, 2
        %v2086 = vmax.f32 %v2084, %v2085
        %v2087 = vrot.slane %v2086, 1
        %v2088 = vmax.f32 %v2086, %v2087
        %v2089 = vsel %vm376, %v2039, -inf
        %v2090 = vrot.slane %v2089, 4
        %v2091 = vmax.f32 %v2089, %v2090
        %v2092 = vrot.slane %v2091, 2
        %v2093 = vmax.f32 %v2091, %v2092
        %v2094 = vrot.slane %v2093, 1
        %v2095 = vmax.f32 %v2093, %v2094
        %v2104 = vsel %vm441, %v2053, %v2046
        %v2105 = vsel %vm443, %v2060, %v2104
        %v2106 = vsel %vm445, %v2067, %v2105
        %v2107 = vsel %vm447, %v2074, %v2106
        %v2108 = vsel %vm449, %v2081, %v2107
        %v2109 = vsel %vm451, %v2088, %v2108
        %v2110 = vsel %vm453, %v2095, %v2109
        %v2112 = vmax.f32 %v1974, %v2110
        %v2113 = vld [vmem:[%s196 + $0x68] sm:$0xff]
        %s2115 = sor.u32 256, 104
        %2116 = vbcast.lane.b32.xlu0 %v291, %s2115
        %v2117 = vpop.permute.xlu0 %2116
        %s2119 = sor.u32 256, 104
        %2120 = vbcast.lane.b32.xlu0 %v298, %s2119
        %v2121 = vpop.permute.xlu0 %2120
        %s2123 = sor.u32 256, 104
        %2124 = vbcast.lane.b32.xlu0 %v305, %s2123
        %v2125 = vpop.permute.xlu0 %2124
        %s2127 = sor.u32 256, 104
        %2128 = vbcast.lane.b32.xlu0 %v312, %s2127
        %v2129 = vpop.permute.xlu0 %2128
        %s2131 = sor.u32 256, 104
        %2132 = vbcast.lane.b32.xlu0 %v319, %s2131
        %v2133 = vpop.permute.xlu0 %2132
        %s2135 = sor.u32 256, 104
        %2136 = vbcast.lane.b32.xlu0 %v326, %s2135
        %v2137 = vpop.permute.xlu0 %2136
        %s2139 = sor.u32 256, 104
        %2140 = vbcast.lane.b32.xlu0 %v333, %s2139
        %v2141 = vpop.permute.xlu0 %2140
        %s2143 = sor.u32 256, 104
        %2144 = vbcast.lane.b32.xlu0 %v340, %s2143
        %v2145 = vpop.permute.xlu0 %2144
        %vm2146 = vcmp.gt.f32.partialorder %v2117, 0.0
        %vm2147 = vcmp.gt.f32.partialorder %v2121, 0.0
        %vm2148 = vcmp.gt.f32.partialorder %v2125, 0.0
        %vm2149 = vcmp.gt.f32.partialorder %v2129, 0.0
        %vm2150 = vcmp.gt.f32.partialorder %v2133, 0.0
        %vm2151 = vcmp.gt.f32.partialorder %v2137, 0.0
        %vm2152 = vcmp.gt.f32.partialorder %v2141, 0.0
        %vm2153 = vcmp.gt.f32.partialorder %v2145, 0.0
        %v2154 = vsel %vm2146, 1, 0
        %v2155 = vsel %vm2147, 1, 0
        %v2156 = vsel %vm2148, 1, 0
        %v2157 = vsel %vm2149, 1, 0
        %v2158 = vsel %vm2150, 1, 0
        %v2159 = vsel %vm2151, 1, 0
        %v2160 = vsel %vm2152, 1, 0
        %v2161 = vsel %vm2153, 1, 0
        %vm2162 = vcmp.eq.s32.totalorder %v2154, 1
        %vm2163 = vcmp.eq.s32.totalorder %v2155, 1
        %vm2164 = vcmp.eq.s32.totalorder %v2156, 1
        %vm2165 = vcmp.eq.s32.totalorder %v2157, 1
        %vm2166 = vcmp.eq.s32.totalorder %v2158, 1
        %vm2167 = vcmp.eq.s32.totalorder %v2159, 1
        %vm2168 = vcmp.eq.s32.totalorder %v2160, 1
        %vm2169 = vcmp.eq.s32.totalorder %v2161, 1
        %v2170 = vsel %vm2162, %v2113, -30000.0
        %v2171 = vsel %vm2163, %v2113, -30000.0
        %v2172 = vsel %vm2164, %v2113, -30000.0
        %v2173 = vsel %vm2165, %v2113, -30000.0
        %v2174 = vsel %vm2166, %v2113, -30000.0
        %v2175 = vsel %vm2167, %v2113, -30000.0
        %v2176 = vsel %vm2168, %v2113, -30000.0
        %v2177 = vsel %vm2169, %v2113, -30000.0
        %v2178 = vsel %vm376, %v2170, -inf
        %v2179 = vrot.slane %v2178, 4
        %v2180 = vmax.f32 %v2178, %v2179
        %v2181 = vrot.slane %v2180, 2
        %v2182 = vmax.f32 %v2180, %v2181
        %v2183 = vrot.slane %v2182, 1
        %v2184 = vmax.f32 %v2182, %v2183
        %v2185 = vsel %vm376, %v2171, -inf
        %v2186 = vrot.slane %v2185, 4
        %v2187 = vmax.f32 %v2185, %v2186
        %v2188 = vrot.slane %v2187, 2
        %v2189 = vmax.f32 %v2187, %v2188
        %v2190 = vrot.slane %v2189, 1
        %v2191 = vmax.f32 %v2189, %v2190
        %v2192 = vsel %vm376, %v2172, -inf
        %v2193 = vrot.slane %v2192, 4
        %v2194 = vmax.f32 %v2192, %v2193
        %v2195 = vrot.slane %v2194, 2
        %v2196 = vmax.f32 %v2194, %v2195
        %v2197 = vrot.slane %v2196, 1
        %v2198 = vmax.f32 %v2196, %v2197
        %v2199 = vsel %vm376, %v2173, -inf
        %v2200 = vrot.slane %v2199, 4
        %v2201 = vmax.f32 %v2199, %v2200
        %v2202 = vrot.slane %v2201, 2
        %v2203 = vmax.f32 %v2201, %v2202
        %v2204 = vrot.slane %v2203, 1
        %v2205 = vmax.f32 %v2203, %v2204
        %v2206 = vsel %vm376, %v2174, -inf
        %v2207 = vrot.slane %v2206, 4
        %v2208 = vmax.f32 %v2206, %v2207
        %v2209 = vrot.slane %v2208, 2
        %v2210 = vmax.f32 %v2208, %v2209
        %v2211 = vrot.slane %v2210, 1
        %v2212 = vmax.f32 %v2210, %v2211
        %v2213 = vsel %vm376, %v2175, -inf
        %v2214 = vrot.slane %v2213, 4
        %v2215 = vmax.f32 %v2213, %v2214
        %v2216 = vrot.slane %v2215, 2
        %v2217 = vmax.f32 %v2215, %v2216
        %v2218 = vrot.slane %v2217, 1
        %v2219 = vmax.f32 %v2217, %v2218
        %v2220 = vsel %vm376, %v2176, -inf
        %v2221 = vrot.slane %v2220, 4
        %v2222 = vmax.f32 %v2220, %v2221
        %v2223 = vrot.slane %v2222, 2
        %v2224 = vmax.f32 %v2222, %v2223
        %v2225 = vrot.slane %v2224, 1
        %v2226 = vmax.f32 %v2224, %v2225
        %v2227 = vsel %vm376, %v2177, -inf
        %v2228 = vrot.slane %v2227, 4
        %v2229 = vmax.f32 %v2227, %v2228
        %v2230 = vrot.slane %v2229, 2
        %v2231 = vmax.f32 %v2229, %v2230
        %v2232 = vrot.slane %v2231, 1
        %v2233 = vmax.f32 %v2231, %v2232
        %v2242 = vsel %vm441, %v2191, %v2184
        %v2243 = vsel %vm443, %v2198, %v2242
        %v2244 = vsel %vm445, %v2205, %v2243
        %v2245 = vsel %vm447, %v2212, %v2244
        %v2246 = vsel %vm449, %v2219, %v2245
        %v2247 = vsel %vm451, %v2226, %v2246
        %v2248 = vsel %vm453, %v2233, %v2247
        %v2250 = vmax.f32 %v2112, %v2248
        %v2251 = vld [vmem:[%s196 + $0x70] sm:$0xff]
        %s2253 = sor.u32 256, 112
        %2254 = vbcast.lane.b32.xlu0 %v291, %s2253
        %v2255 = vpop.permute.xlu0 %2254
        %s2257 = sor.u32 256, 112
        %2258 = vbcast.lane.b32.xlu0 %v298, %s2257
        %v2259 = vpop.permute.xlu0 %2258
        %s2261 = sor.u32 256, 112
        %2262 = vbcast.lane.b32.xlu0 %v305, %s2261
        %v2263 = vpop.permute.xlu0 %2262
        %s2265 = sor.u32 256, 112
        %2266 = vbcast.lane.b32.xlu0 %v312, %s2265
        %v2267 = vpop.permute.xlu0 %2266
        %s2269 = sor.u32 256, 112
        %2270 = vbcast.lane.b32.xlu0 %v319, %s2269
        %v2271 = vpop.permute.xlu0 %2270
        %s2273 = sor.u32 256, 112
        %2274 = vbcast.lane.b32.xlu0 %v326, %s2273
        %v2275 = vpop.permute.xlu0 %2274
        %s2277 = sor.u32 256, 112
        %2278 = vbcast.lane.b32.xlu0 %v333, %s2277
        %v2279 = vpop.permute.xlu0 %2278
        %s2281 = sor.u32 256, 112
        %2282 = vbcast.lane.b32.xlu0 %v340, %s2281
        %v2283 = vpop.permute.xlu0 %2282
        %vm2284 = vcmp.gt.f32.partialorder %v2255, 0.0
        %vm2285 = vcmp.gt.f32.partialorder %v2259, 0.0
        %vm2286 = vcmp.gt.f32.partialorder %v2263, 0.0
        %vm2287 = vcmp.gt.f32.partialorder %v2267, 0.0
        %vm2288 = vcmp.gt.f32.partialorder %v2271, 0.0
        %vm2289 = vcmp.gt.f32.partialorder %v2275, 0.0
        %vm2290 = vcmp.gt.f32.partialorder %v2279, 0.0
        %vm2291 = vcmp.gt.f32.partialorder %v2283, 0.0
        %v2292 = vsel %vm2284, 1, 0
        %v2293 = vsel %vm2285, 1, 0
        %v2294 = vsel %vm2286, 1, 0
        %v2295 = vsel %vm2287, 1, 0
        %v2296 = vsel %vm2288, 1, 0
        %v2297 = vsel %vm2289, 1, 0
        %v2298 = vsel %vm2290, 1, 0
        %v2299 = vsel %vm2291, 1, 0
        %vm2300 = vcmp.eq.s32.totalorder %v2292, 1
        %vm2301 = vcmp.eq.s32.totalorder %v2293, 1
        %vm2302 = vcmp.eq.s32.totalorder %v2294, 1
        %vm2303 = vcmp.eq.s32.totalorder %v2295, 1
        %vm2304 = vcmp.eq.s32.totalorder %v2296, 1
        %vm2305 = vcmp.eq.s32.totalorder %v2297, 1
        %vm2306 = vcmp.eq.s32.totalorder %v2298, 1
        %vm2307 = vcmp.eq.s32.totalorder %v2299, 1
        %v2308 = vsel %vm2300, %v2251, -30000.0
        %v2309 = vsel %vm2301, %v2251, -30000.0
        %v2310 = vsel %vm2302, %v2251, -30000.0
        %v2311 = vsel %vm2303, %v2251, -30000.0
        %v2312 = vsel %vm2304, %v2251, -30000.0
        %v2313 = vsel %vm2305, %v2251, -30000.0
        %v2314 = vsel %vm2306, %v2251, -30000.0
        %v2315 = vsel %vm2307, %v2251, -30000.0
        %v2316 = vsel %vm376, %v2308, -inf
        %v2317 = vrot.slane %v2316, 4
        %v2318 = vmax.f32 %v2316, %v2317
        %v2319 = vrot.slane %v2318, 2
        %v2320 = vmax.f32 %v2318, %v2319
        %v2321 = vrot.slane %v2320, 1
        %v2322 = vmax.f32 %v2320, %v2321
        %v2323 = vsel %vm376, %v2309, -inf
        %v2324 = vrot.slane %v2323, 4
        %v2325 = vmax.f32 %v2323, %v2324
        %v2326 = vrot.slane %v2325, 2
        %v2327 = vmax.f32 %v2325, %v2326
        %v2328 = vrot.slane %v2327, 1
        %v2329 = vmax.f32 %v2327, %v2328
        %v2330 = vsel %vm376, %v2310, -inf
        %v2331 = vrot.slane %v2330, 4
        %v2332 = vmax.f32 %v2330, %v2331
        %v2333 = vrot.slane %v2332, 2
        %v2334 = vmax.f32 %v2332, %v2333
        %v2335 = vrot.slane %v2334, 1
        %v2336 = vmax.f32 %v2334, %v2335
        %v2337 = vsel %vm376, %v2311, -inf
        %v2338 = vrot.slane %v2337, 4
        %v2339 = vmax.f32 %v2337, %v2338
        %v2340 = vrot.slane %v2339, 2
        %v2341 = vmax.f32 %v2339, %v2340
        %v2342 = vrot.slane %v2341, 1
        %v2343 = vmax.f32 %v2341, %v2342
        %v2344 = vsel %vm376, %v2312, -inf
        %v2345 = vrot.slane %v2344, 4
        %v2346 = vmax.f32 %v2344, %v2345
        %v2347 = vrot.slane %v2346, 2
        %v2348 = vmax.f32 %v2346, %v2347
        %v2349 = vrot.slane %v2348, 1
        %v2350 = vmax.f32 %v2348, %v2349
        %v2351 = vsel %vm376, %v2313, -inf
        %v2352 = vrot.slane %v2351, 4
        %v2353 = vmax.f32 %v2351, %v2352
        %v2354 = vrot.slane %v2353, 2
        %v2355 = vmax.f32 %v2353, %v2354
        %v2356 = vrot.slane %v2355, 1
        %v2357 = vmax.f32 %v2355, %v2356
        %v2358 = vsel %vm376, %v2314, -inf
        %v2359 = vrot.slane %v2358, 4
        %v2360 = vmax.f32 %v2358, %v2359
        %v2361 = vrot.slane %v2360, 2
        %v2362 = vmax.f32 %v2360, %v2361
        %v2363 = vrot.slane %v2362, 1
        %v2364 = vmax.f32 %v2362, %v2363
        %v2365 = vsel %vm376, %v2315, -inf
        %v2366 = vrot.slane %v2365, 4
        %v2367 = vmax.f32 %v2365, %v2366
        %v2368 = vrot.slane %v2367, 2
        %v2369 = vmax.f32 %v2367, %v2368
        %v2370 = vrot.slane %v2369, 1
        %v2371 = vmax.f32 %v2369, %v2370
        %v2380 = vsel %vm441, %v2329, %v2322
        %v2381 = vsel %vm443, %v2336, %v2380
        %v2382 = vsel %vm445, %v2343, %v2381
        %v2383 = vsel %vm447, %v2350, %v2382
        %v2384 = vsel %vm449, %v2357, %v2383
        %v2385 = vsel %vm451, %v2364, %v2384
        %v2386 = vsel %vm453, %v2371, %v2385
        %v2388 = vmax.f32 %v2250, %v2386
        %v2389 = vld [vmem:[%s196 + $0x78] sm:$0xff]
        %s2391 = sor.u32 256, 120
        %2392 = vbcast.lane.b32.xlu0 %v291, %s2391
        %v2393 = vpop.permute.xlu0 %2392
        %s2395 = sor.u32 256, 120
        %2396 = vbcast.lane.b32.xlu0 %v298, %s2395
        %v2397 = vpop.permute.xlu0 %2396
        %s2399 = sor.u32 256, 120
        %2400 = vbcast.lane.b32.xlu0 %v305, %s2399
        %v2401 = vpop.permute.xlu0 %2400
        %s2403 = sor.u32 256, 120
        %2404 = vbcast.lane.b32.xlu0 %v312, %s2403
        %v2405 = vpop.permute.xlu0 %2404
        %s2407 = sor.u32 256, 120
        %2408 = vbcast.lane.b32.xlu0 %v319, %s2407
        %v2409 = vpop.permute.xlu0 %2408
        %s2411 = sor.u32 256, 120
        %2412 = vbcast.lane.b32.xlu0 %v326, %s2411
        %v2413 = vpop.permute.xlu0 %2412
        %s2415 = sor.u32 256, 120
        %2416 = vbcast.lane.b32.xlu0 %v333, %s2415
        %v2417 = vpop.permute.xlu0 %2416
        %s2419 = sor.u32 256, 120
        %2420 = vbcast.lane.b32.xlu0 %v340, %s2419
        %v2421 = vpop.permute.xlu0 %2420
        %vm2422 = vcmp.gt.f32.partialorder %v2393, 0.0
        %vm2423 = vcmp.gt.f32.partialorder %v2397, 0.0
        %vm2424 = vcmp.gt.f32.partialorder %v2401, 0.0
        %vm2425 = vcmp.gt.f32.partialorder %v2405, 0.0
        %vm2426 = vcmp.gt.f32.partialorder %v2409, 0.0
        %vm2427 = vcmp.gt.f32.partialorder %v2413, 0.0
        %vm2428 = vcmp.gt.f32.partialorder %v2417, 0.0
        %vm2429 = vcmp.gt.f32.partialorder %v2421, 0.0
        %v2430 = vsel %vm2422, 1, 0
        %v2431 = vsel %vm2423, 1, 0
        %v2432 = vsel %vm2424, 1, 0
        %v2433 = vsel %vm2425, 1, 0
        %v2434 = vsel %vm2426, 1, 0
        %v2435 = vsel %vm2427, 1, 0
        %v2436 = vsel %vm2428, 1, 0
        %v2437 = vsel %vm2429, 1, 0
        %vm2438 = vcmp.eq.s32.totalorder %v2430, 1
        %vm2439 = vcmp.eq.s32.totalorder %v2431, 1
        %vm2440 = vcmp.eq.s32.totalorder %v2432, 1
        %vm2441 = vcmp.eq.s32.totalorder %v2433, 1
        %vm2442 = vcmp.eq.s32.totalorder %v2434, 1
        %vm2443 = vcmp.eq.s32.totalorder %v2435, 1
        %vm2444 = vcmp.eq.s32.totalorder %v2436, 1
        %vm2445 = vcmp.eq.s32.totalorder %v2437, 1
        %v2446 = vsel %vm2438, %v2389, -30000.0
        %v2447 = vsel %vm2439, %v2389, -30000.0
        %v2448 = vsel %vm2440, %v2389, -30000.0
        %v2449 = vsel %vm2441, %v2389, -30000.0
        %v2450 = vsel %vm2442, %v2389, -30000.0
        %v2451 = vsel %vm2443, %v2389, -30000.0
        %v2452 = vsel %vm2444, %v2389, -30000.0
        %v2453 = vsel %vm2445, %v2389, -30000.0
        %v2454 = vsel %vm376, %v2446, -inf
        %v2455 = vrot.slane %v2454, 4
        %v2456 = vmax.f32 %v2454, %v2455
        %v2457 = vrot.slane %v2456, 2
        %v2458 = vmax.f32 %v2456, %v2457
        %v2459 = vrot.slane %v2458, 1
        %v2460 = vmax.f32 %v2458, %v2459
        %v2461 = vsel %vm376, %v2447, -inf
        %v2462 = vrot.slane %v2461, 4
        %v2463 = vmax.f32 %v2461, %v2462
        %v2464 = vrot.slane %v2463, 2
        %v2465 = vmax.f32 %v2463, %v2464
        %v2466 = vrot.slane %v2465, 1
        %v2467 = vmax.f32 %v2465, %v2466
        %v2468 = vsel %vm376, %v2448, -inf
        %v2469 = vrot.slane %v2468, 4
        %v2470 = vmax.f32 %v2468, %v2469
        %v2471 = vrot.slane %v2470, 2
        %v2472 = vmax.f32 %v2470, %v2471
        %v2473 = vrot.slane %v2472, 1
        %v2474 = vmax.f32 %v2472, %v2473
        %v2475 = vsel %vm376, %v2449, -inf
        %v2476 = vrot.slane %v2475, 4
        %v2477 = vmax.f32 %v2475, %v2476
        %v2478 = vrot.slane %v2477, 2
        %v2479 = vmax.f32 %v2477, %v2478
        %v2480 = vrot.slane %v2479, 1
        %v2481 = vmax.f32 %v2479, %v2480
        %v2482 = vsel %vm376, %v2450, -inf
        %v2483 = vrot.slane %v2482, 4
        %v2484 = vmax.f32 %v2482, %v2483
        %v2485 = vrot.slane %v2484, 2
        %v2486 = vmax.f32 %v2484, %v2485
        %v2487 = vrot.slane %v2486, 1
        %v2488 = vmax.f32 %v2486, %v2487
        %v2489 = vsel %vm376, %v2451, -inf
        %v2490 = vrot.slane %v2489, 4
        %v2491 = vmax.f32 %v2489, %v2490
        %v2492 = vrot.slane %v2491, 2
        %v2493 = vmax.f32 %v2491, %v2492
        %v2494 = vrot.slane %v2493, 1
        %v2495 = vmax.f32 %v2493, %v2494
        %v2496 = vsel %vm376, %v2452, -inf
        %v2497 = vrot.slane %v2496, 4
        %v2498 = vmax.f32 %v2496, %v2497
        %v2499 = vrot.slane %v2498, 2
        %v2500 = vmax.f32 %v2498, %v2499
        %v2501 = vrot.slane %v2500, 1
        %v2502 = vmax.f32 %v2500, %v2501
        %v2503 = vsel %vm376, %v2453, -inf
        %v2504 = vrot.slane %v2503, 4
        %v2505 = vmax.f32 %v2503, %v2504
        %v2506 = vrot.slane %v2505, 2
        %v2507 = vmax.f32 %v2505, %v2506
        %v2508 = vrot.slane %v2507, 1
        %v2509 = vmax.f32 %v2507, %v2508
        %v2518 = vsel %vm441, %v2467, %v2460
        %v2519 = vsel %vm443, %v2474, %v2518
        %v2520 = vsel %vm445, %v2481, %v2519
        %v2521 = vsel %vm447, %v2488, %v2520
        %v2522 = vsel %vm449, %v2495, %v2521
        %v2523 = vsel %vm451, %v2502, %v2522
        %v2524 = vsel %vm453, %v2509, %v2523
        %v2526 = vmax.f32 %v2388, %v2524
        %2527 = vst.msk [vmem:[%s283] sm:$0xff] %vm376, %v2526
      $region37: #{tpu_custom_call.1} parent=27 // loop_footer
        %s281 = sadd.s32 1, %s277
      $region38: #{tpu_custom_call.1} parent=27 // loop_footer_branch
        %276 = sbr.rel target = $region34
      $region39: #{tpu_custom_call.1} parent=27 // loop_exit
        _
      // Predicated region
      $region40: #{tpu_custom_call.1} parent=27 // pred_check
        %p2528 = pneg %p203
      $region41: #{tpu_custom_call.1} parent=27 // pred_check_branch
        %2530 = sbr.rel (%p2528) target = $region43
      $region42: #{tpu_custom_call.1} parent=27 // pred_region
        %v2531 = vld [vmem:[#allocation2] sm:$0xff]
        %v2532 = vld [vmem:[#allocation2 + $0x8] sm:$0xff]
        %v2533 = vld [vmem:[#allocation2 + $0x10] sm:$0xff]
        %v2534 = vld [vmem:[#allocation2 + $0x18] sm:$0xff]
        %v2535 = vld [vmem:[#allocation2 + $0x20] sm:$0xff]
        %v2536 = vld [vmem:[#allocation2 + $0x28] sm:$0xff]
        %v2537 = vld [vmem:[#allocation2 + $0x30] sm:$0xff]
        %v2538 = vld [vmem:[#allocation2 + $0x38] sm:$0xff]
        %v2539 = vld [vmem:[#allocation2 + $0x40] sm:$0xff]
        %v2540 = vld [vmem:[#allocation2 + $0x48] sm:$0xff]
        %v2541 = vld [vmem:[#allocation2 + $0x50] sm:$0xff]
        %v2542 = vld [vmem:[#allocation2 + $0x58] sm:$0xff]
        %v2543 = vld [vmem:[#allocation2 + $0x60] sm:$0xff]
        %v2544 = vld [vmem:[#allocation2 + $0x68] sm:$0xff]
        %v2545 = vld [vmem:[#allocation2 + $0x70] sm:$0xff]
        %v2546 = vld [vmem:[#allocation2 + $0x78] sm:$0xff]
        %v2547 = vpack.c.bf16 %v2532, %v2531
        %v2548 = vpack.c.bf16 %v2534, %v2533
        %v2549 = vpack.c.bf16 %v2536, %v2535
        %v2550 = vpack.c.bf16 %v2538, %v2537
        %v2551 = vpack.c.bf16 %v2540, %v2539
        %v2552 = vpack.c.bf16 %v2542, %v2541
        %v2553 = vpack.c.bf16 %v2544, %v2543
        %v2554 = vpack.c.bf16 %v2546, %v2545
        %v2563 = vunpack.c.l.b16 %v2547
        %v2564 = vunpack.c.h.b16 %v2547
        %v2565 = vunpack.c.l.b16 %v2548
        %v2566 = vunpack.c.h.b16 %v2548
        %v2567 = vunpack.c.l.b16 %v2549
        %v2568 = vunpack.c.h.b16 %v2549
        %v2569 = vunpack.c.l.b16 %v2550
        %v2570 = vunpack.c.h.b16 %v2550
        %v2571 = vunpack.c.l.b16 %v2551
        %v2572 = vunpack.c.h.b16 %v2551
        %v2573 = vunpack.c.l.b16 %v2552
        %v2574 = vunpack.c.h.b16 %v2552
        %v2575 = vunpack.c.l.b16 %v2553
        %v2576 = vunpack.c.h.b16 %v2553
        %v2577 = vunpack.c.l.b16 %v2554
        %v2578 = vunpack.c.h.b16 %v2554
        %v2579 = vpack.c.b16 %v2563, %v2563
        %v2580 = vpack.c.b16 %v2564, %v2564
        %v2581 = vpack.c.b16 %v2565, %v2565
        %v2582 = vpack.c.b16 %v2566, %v2566
        %v2583 = vpack.c.b16 %v2567, %v2567
        %v2584 = vpack.c.b16 %v2568, %v2568
        %v2585 = vpack.c.b16 %v2569, %v2569
        %v2586 = vpack.c.b16 %v2570, %v2570
        %v2587 = vpack.c.b16 %v2571, %v2571
        %v2588 = vpack.c.b16 %v2572, %v2572
        %v2589 = vpack.c.b16 %v2573, %v2573
        %v2590 = vpack.c.b16 %v2574, %v2574
        %v2591 = vpack.c.b16 %v2575, %v2575
        %v2592 = vpack.c.b16 %v2576, %v2576
        %v2593 = vpack.c.b16 %v2577, %v2577
        %v2594 = vpack.c.b16 %v2578, %v2578
        %vm2611 = vcmask 257024
        %2612 = vst.msk [vmem:[%s202] sm:$0xf] %vm2611, %v2579
        %2613 = vst.msk [vmem:[%s202 + $0x4] sm:$0xf] %vm2611, %v2580
        %2614 = vst.msk [vmem:[%s202 + $0x8] sm:$0xf] %vm2611, %v2581
        %2615 = vst.msk [vmem:[%s202 + $0xc] sm:$0xf] %vm2611, %v2582
        %2616 = vst.msk [vmem:[%s202 + $0x10] sm:$0xf] %vm2611, %v2583
        %2617 = vst.msk [vmem:[%s202 + $0x14] sm:$0xf] %vm2611, %v2584
        %2618 = vst.msk [vmem:[%s202 + $0x18] sm:$0xf] %vm2611, %v2585
        %2619 = vst.msk [vmem:[%s202 + $0x1c] sm:$0xf] %vm2611, %v2586
        %2620 = vst.msk [vmem:[%s202 + $0x20] sm:$0xf] %vm2611, %v2587
        %2621 = vst.msk [vmem:[%s202 + $0x24] sm:$0xf] %vm2611, %v2588
        %2622 = vst.msk [vmem:[%s202 + $0x28] sm:$0xf] %vm2611, %v2589
        %2623 = vst.msk [vmem:[%s202 + $0x2c] sm:$0xf] %vm2611, %v2590
        %2624 = vst.msk [vmem:[%s202 + $0x30] sm:$0xf] %vm2611, %v2591
        %2625 = vst.msk [vmem:[%s202 + $0x34] sm:$0xf] %vm2611, %v2592
        %2626 = vst.msk [vmem:[%s202 + $0x38] sm:$0xf] %vm2611, %v2593
        %2627 = vst.msk [vmem:[%s202 + $0x3c] sm:$0xf] %vm2611, %v2594
      $region43: #{tpu_custom_call.1} parent=27 // pred_fallthru
        _
      %p2628 = scmp.lt.s32.totalorder %s17, 1
      %s2629 = scalar_select %p2628, %s17, 1
      %s2630 = smul.addr %s2629, 16
      %s2631 = smul.addr %s2630, 4
      %s2632 = scalar_lea.vmem %s2, %s2631
      // Predicated region
      $region44: #{tpu_custom_call.1} parent=27 // pred_check
        %p2633 = pneg %p99
      $region45: #{tpu_custom_call.1} parent=27 // pred_check_branch
        %2635 = sbr.rel (%p2633) target = $region47
      $region46: #{tpu_custom_call.1} parent=27 // pred_region
        _
      $region47: #{tpu_custom_call.1} parent=27 // pred_fallthru
        _
    $region28: #{tpu_custom_call.1} parent=5 // pred_fallthru
      _
    %p2636 = scmp.le.s32.totalorder 2, %s8
    // Predicated region
    $region48: #{tpu_custom_call.1} parent=5 // pred_check
      %p2637 = pneg %p2636
    $region49: #{tpu_custom_call.1} parent=5 // pred_check_branch
      %2639 = sbr.rel (%p2637) target = $region51
    $region50: #{tpu_custom_call.1} parent=5 // pred_region
      %s2640 = ssub.s32 %s8, 2
      // Predicated region
      $region52: #{tpu_custom_call.1} parent=50 // pred_check
        %p2641 = pneg %p105
      $region53: #{tpu_custom_call.1} parent=50 // pred_check_branch
        %2643 = sbr.rel (%p2641) target = $region55
      $region54: #{tpu_custom_call.1} parent=50 // pred_region
        %p2644 = scmp.lt.s32.totalorder %s19, 1
        %s2645 = scalar_select %p2644, %s19, 1
        %s2646 = smul.addr %s2645, 16
        %s2647 = smul.addr %s2646, 4
        %s2648 = scalar_lea.vmem %s2, %s2647
      $region55: #{tpu_custom_call.1} parent=50 // pred_fallthru
        _
    $region51: #{tpu_custom_call.1} parent=5 // pred_fallthru
      _
  $region6: #{tpu_custom_call.1} parent=0 // loop_footer
    %s12 = sadd.s32 1, %s8
  $region7: #{tpu_custom_call.1} parent=0 // loop_footer_branch
    %7 = sbr.rel target = $region3
  $region8: #{tpu_custom_call.1} parent=0 // loop_exit
    _

</llo_original>
